<compile_context>
chip_gen: v7x
topology: tpu7x:2x2x1
jax: 0.10.0
libtpu: 0.0.40
codegen_flags: <defaults>
</compile_context>

<pallas_src>
import math

import jax
import jax.numpy as jnp
from jax.experimental import pallas as pl
from jax.experimental.pallas import tpu as pltpu


STATE_SIZE = 4   # CartPole observation dim
HIDDEN = 24
OUT = 1          # Critic value head


def critic_kernel(x_ref, w1t_ref, b1_ref, w2t_ref, b2_ref, w3_ref, b3_ref, o_ref):
    # Natural layout: batch on sublanes (second-to-last axis), features on lanes.
    #   x_ref  : (Bt, 4)        w1t_ref: (4, 24)     b1_ref: (1, 24)
    #   w2t_ref: (24, 24)       b2_ref : (1, 24)
    #   w3_ref : (1, 24)        b3_ref : (1,) SMEM scalar
    #   o_ref  : (Bt, 1)
    x = x_ref[...]                               # (Bt, 4) f32
    w1t = w1t_ref[...]                           # (4, 24)

    # fc1 (K=4): VPU broadcast multiply-adds -- too small to be worth an MXU
    # fill/drain round trip.  (Bt,1) * (1,24) -> (Bt,24)
    h1 = x[:, 0:1] * w1t[0:1, :]
    for k in range(1, STATE_SIZE):
        h1 = h1 + x[:, k:k + 1] * w1t[k:k + 1, :]
    h1 = jnp.maximum(h1 + b1_ref[...], 0.0)      # (Bt, 24)

    # fc2 (24x24): the only matmul worth the MXU; batch fills the M axis.
    h2 = jnp.dot(h1, w2t_ref[...], preferred_element_type=jnp.float32) + b2_ref[...]
    h2 = jnp.maximum(h2, 0.0)                    # (Bt, 24)

    # fc3 (N=1): elementwise multiply + cross-lane reduction (XLU), no MXU.
    v = jnp.sum(h2 * w3_ref[...], axis=1, keepdims=True) + b3_ref[0]   # (Bt, 1)
    o_ref[...] = v.astype(o_ref.dtype)


def _choose_block(batch):
    # <=128: single block.  >128: at least 2 steps so v7x's two TensorCores
    # both run ("parallel" grid axis); cap block growth at 1024 rows (beyond
    # that the (Bt,24) intermediates spill, which is still cheaper than 2-4x
    # more grid steps, but 1024 is plenty for realistic vectorized-env sizes).
    if batch <= 128:
        return 128
    half = -(-batch // 2)                        # cdiv(batch, 2)
    return min(1024, max(128, ((half + 127) // 128) * 128))


def critic_forward(x, params, block_b=None, min_pallas_batch=33):
    """x: (batch, STATE_SIZE) f32 -> (batch, 1) f32, same semantics as Critic.forward."""
    w1t, b1, w2t, b2, w3, b3 = params
    batch = x.shape[0]

    # Per-env-step fast path: a Pallas launch is pure overhead for a few rows.
    if batch < min_pallas_batch:
        h1 = jnp.maximum(x @ w1t + b1, 0.0)
        h2 = jnp.maximum(h1 @ w2t + b2, 0.0)
        return h2 @ w3.T + b3

    if block_b is None:
        block_b = _choose_block(batch)
    n_blocks = pl.cdiv(batch, block_b)
    padded = n_blocks * block_b

    # Only wrapper-side data movement: pad the batch dim to a whole block.
    xp = x if padded == batch else jnp.pad(x, ((0, padded - batch), (0, 0)))

    out = pl.pallas_call(
        critic_kernel,
        out_shape=jax.ShapeDtypeStruct((padded, OUT), jnp.float32),
        grid=(n_blocks,),
        in_specs=[
            pl.BlockSpec((block_b, STATE_SIZE), lambda i: (i, 0)),   # x, tiled over batch
            pl.BlockSpec((STATE_SIZE, HIDDEN), lambda i: (0, 0)),    # w1.T (VMEM-resident)
            pl.BlockSpec((1, HIDDEN), lambda i: (0, 0)),             # b1 row
            pl.BlockSpec((HIDDEN, HIDDEN), lambda i: (0, 0)),        # w2.T
            pl.BlockSpec((1, HIDDEN), lambda i: (0, 0)),             # b2 row
            pl.BlockSpec((1, HIDDEN), lambda i: (0, 0)),             # w3 row
            pl.BlockSpec(memory_space=pltpu.MemorySpace.SMEM),       # b3 scalar
        ],
        out_specs=pl.BlockSpec((block_b, OUT), lambda i: (i, 0)),    # natural (batch, 1)
        compiler_params=pltpu.CompilerParams(
            dimension_semantics=("parallel",)),                      # v7x: 2 TCs split steps
    )(xp, w1t, b1, w2t, b2, w3, b3)

    return out[:batch]                                               # (batch, 1)


def init_linear(key, fan_in, fan_out):
    # Mimics torch.nn.Linear default init: U(-1/sqrt(fan_in), 1/sqrt(fan_in)).
    kw, kb = jax.random.split(key)
    bound = 1.0 / math.sqrt(fan_in)
    w = jax.random.uniform(kw, (fan_out, fan_in), jnp.float32, -bound, bound)  # torch (out, in)
    b = jax.random.uniform(kb, (fan_out,), jnp.float32, -bound, bound)
    return w, b


def init_critic_params(key):
    k1, k2, k3 = jax.random.split(key, 3)
    w1, b1 = init_linear(k1, STATE_SIZE, HIDDEN)   # (24, 4), (24,)
    w2, b2 = init_linear(k2, HIDDEN, HIDDEN)       # (24, 24), (24,)
    w3, b3 = init_linear(k3, HIDDEN, OUT)          # (1, 24), (1,)
    return (w1.T, b1.reshape(1, HIDDEN),           # (4, 24), (1, 24)
            w2.T, b2.reshape(1, HIDDEN),           # (24, 24), (1, 24)
            w3, b3)                                # (1, 24) row, (1,) scalar


def critic_reference(x, params):
    # Pure-JAX reference in standard (batch, features) layout.
    w1t, b1, w2t, b2, w3, b3 = params
    h1 = jnp.maximum(x @ w1t + b1, 0.0)
    h2 = jnp.maximum(h1 @ w2t + b2, 0.0)
    return h2 @ w3.T + b3                          # (batch, 1)


if __name__ == "__main__":
    key = jax.random.PRNGKey(0)
    k_params, k_x1, k_x2, k_x3 = jax.random.split(key, 4)

    params = init_critic_params(k_params)
    fwd = jax.jit(critic_forward)

    # Vectorized-env batch: exercises the Pallas kernel with a 2-step grid + padding.
    x_big = jax.random.normal(k_x2, (300, STATE_SIZE), jnp.float32)
    out_big = jax.block_until_ready(fwd(x_big, params))
    ref_big = critic_reference(x_big, params)
    assert out_big.shape == (300, OUT)
    assert jnp.allclose(out_big, ref_big, atol=1e-5, rtol=1e-4)

    # Larger batch, no padding, 2 parallel blocks of 512.
    x_huge = jax.random.normal(k_x3, (1024, STATE_SIZE), jnp.float32)
    out_huge = jax.block_until_ready(fwd(x_huge, params))
    ref_huge = critic_reference(x_huge, params)
    assert out_huge.shape == (1024, OUT)
    assert jnp.allclose(out_huge, ref_huge, atol=1e-5, rtol=1e-4)

    # Small per-env-step batch: jnp fast path (Pallas launch would be pure overhead).
    x_small = jax.random.normal(k_x1, (2, STATE_SIZE), jnp.float32)
    out_small = jax.block_until_ready(fwd(x_small, params))
    assert out_small.shape == (2, OUT)
    assert jnp.allclose(out_small, critic_reference(x_small, params), atol=1e-5, rtol=1e-4)

    print("KERNEL_OK")
</pallas_src>

<mosaic_0001>
module attributes {stable_mosaic.version = 11 : i64} {
  func.func @critic_kernel(%arg0: i32, %arg1: memref<256x4xf32, #tpu.memory_space<vmem>>, %arg2: memref<4x24xf32, #tpu.memory_space<vmem>>, %arg3: memref<1x24xf32, #tpu.memory_space<vmem>>, %arg4: memref<24x24xf32, #tpu.memory_space<vmem>>, %arg5: memref<1x24xf32, #tpu.memory_space<vmem>>, %arg6: memref<1x24xf32, #tpu.memory_space<vmem>>, %arg7: memref<1xf32, #tpu.memory_space<smem>>, %arg8: memref<256x1xf32, #tpu.memory_space<vmem>>) attributes {dimension_semantics = [#tpu.dimension_semantics<parallel>], iteration_bounds = array<i64: 2>, scalar_prefetch = 0 : i64, scratch_operands = 0 : i64, tpu.core_type = #tpu.core_type<tc>, window_params = [{transform_indices = @transform_0, window_bounds = array<i64: 256, 4>}, {pipeline_mode = #tpu.pipeline_mode<synchronous>, transform_indices = @transform_1, window_bounds = array<i64: 4, 24>}, {pipeline_mode = #tpu.pipeline_mode<synchronous>, transform_indices = @transform_2, window_bounds = array<i64: 1, 24>}, {pipeline_mode = #tpu.pipeline_mode<synchronous>, transform_indices = @transform_3, window_bounds = array<i64: 24, 24>}, {pipeline_mode = #tpu.pipeline_mode<synchronous>, transform_indices = @transform_4, window_bounds = array<i64: 1, 24>}, {pipeline_mode = #tpu.pipeline_mode<synchronous>, transform_indices = @transform_5, window_bounds = array<i64: 1, 24>}, {transform_indices = @transform_6, window_bounds = array<i64: 1>}, {transform_indices = @transform_7, window_bounds = array<i64: 256, 1>}]} {
    %c0 = arith.constant 0 : index
    %c0_0 = arith.constant 0 : index
    %0 = vector.load %arg1[%c0, %c0_0] : memref<256x4xf32, #tpu.memory_space<vmem>>, vector<256x4xf32>
    %c0_1 = arith.constant 0 : index
    %c0_2 = arith.constant 0 : index
    %1 = vector.load %arg2[%c0_1, %c0_2] : memref<4x24xf32, #tpu.memory_space<vmem>>, vector<4x24xf32>
    %2 = vector.extract_strided_slice %0 {offsets = [0, 0], sizes = [256, 1], strides = [1, 1]} : vector<256x4xf32> to vector<256x1xf32>
    %3 = vector.extract_strided_slice %1 {offsets = [0, 0], sizes = [1, 24], strides = [1, 1]} : vector<4x24xf32> to vector<1x24xf32>
    %4 = vector.broadcast %2 : vector<256x1xf32> to vector<256x24xf32>
    %5 = vector.broadcast %3 : vector<1x24xf32> to vector<256x24xf32>
    %6 = arith.mulf %4, %5 : vector<256x24xf32>
    %7 = vector.extract_strided_slice %0 {offsets = [0, 1], sizes = [256, 1], strides = [1, 1]} : vector<256x4xf32> to vector<256x1xf32>
    %8 = vector.extract_strided_slice %1 {offsets = [1, 0], sizes = [1, 24], strides = [1, 1]} : vector<4x24xf32> to vector<1x24xf32>
    %9 = vector.broadcast %7 : vector<256x1xf32> to vector<256x24xf32>
    %10 = vector.broadcast %8 : vector<1x24xf32> to vector<256x24xf32>
    %11 = arith.mulf %9, %10 : vector<256x24xf32>
    %12 = arith.addf %6, %11 : vector<256x24xf32>
    %13 = vector.extract_strided_slice %0 {offsets = [0, 2], sizes = [256, 1], strides = [1, 1]} : vector<256x4xf32> to vector<256x1xf32>
    %14 = vector.extract_strided_slice %1 {offsets = [2, 0], sizes = [1, 24], strides = [1, 1]} : vector<4x24xf32> to vector<1x24xf32>
    %15 = vector.broadcast %13 : vector<256x1xf32> to vector<256x24xf32>
    %16 = vector.broadcast %14 : vector<1x24xf32> to vector<256x24xf32>
    %17 = arith.mulf %15, %16 : vector<256x24xf32>
    %18 = arith.addf %12, %17 : vector<256x24xf32>
    %19 = vector.extract_strided_slice %0 {offsets = [0, 3], sizes = [256, 1], strides = [1, 1]} : vector<256x4xf32> to vector<256x1xf32>
    %20 = vector.extract_strided_slice %1 {offsets = [3, 0], sizes = [1, 24], strides = [1, 1]} : vector<4x24xf32> to vector<1x24xf32>
    %21 = vector.broadcast %19 : vector<256x1xf32> to vector<256x24xf32>
    %22 = vector.broadcast %20 : vector<1x24xf32> to vector<256x24xf32>
    %23 = arith.mulf %21, %22 : vector<256x24xf32>
    %24 = arith.addf %18, %23 : vector<256x24xf32>
    %c0_3 = arith.constant 0 : index
    %c0_4 = arith.constant 0 : index
    %25 = vector.load %arg3[%c0_3, %c0_4] : memref<1x24xf32, #tpu.memory_space<vmem>>, vector<1x24xf32>
    %26 = vector.broadcast %25 : vector<1x24xf32> to vector<256x24xf32>
    %27 = arith.addf %24, %26 : vector<256x24xf32>
    %cst = arith.constant 0.000000e+00 : f32
    %28 = vector.broadcast %cst : f32 to vector<256x24xf32>
    %29 = arith.maximumf %27, %28 : vector<256x24xf32>
    %c0_5 = arith.constant 0 : index
    %c0_6 = arith.constant 0 : index
    %30 = vector.load %arg4[%c0_5, %c0_6] : memref<24x24xf32, #tpu.memory_space<vmem>>, vector<24x24xf32>
    %cst_7 = arith.constant dense<0.000000e+00> : vector<256x24xf32>
    %31 = tpu.matmul %29, %30, %cst_7 {dimension_numbers = #tpu.dot_dimension_numbers<[1], [0], [0], [1], [0, 0, 1, 1], [], []>} : vector<256x24xf32>, vector<24x24xf32>, vector<256x24xf32> -> vector<256x24xf32>
    %c0_8 = arith.constant 0 : index
    %c0_9 = arith.constant 0 : index
    %32 = vector.load %arg5[%c0_8, %c0_9] : memref<1x24xf32, #tpu.memory_space<vmem>>, vector<1x24xf32>
    %33 = vector.broadcast %32 : vector<1x24xf32> to vector<256x24xf32>
    %34 = arith.addf %31, %33 : vector<256x24xf32>
    %cst_10 = arith.constant 0.000000e+00 : f32
    %35 = vector.broadcast %cst_10 : f32 to vector<256x24xf32>
    %36 = arith.maximumf %34, %35 : vector<256x24xf32>
    %c0_11 = arith.constant 0 : index
    %c0_12 = arith.constant 0 : index
    %37 = vector.load %arg6[%c0_11, %c0_12] : memref<1x24xf32, #tpu.memory_space<vmem>>, vector<1x24xf32>
    %38 = vector.broadcast %37 : vector<1x24xf32> to vector<256x24xf32>
    %39 = arith.mulf %36, %38 : vector<256x24xf32>
    %cst_13 = arith.constant dense<0.000000e+00> : vector<256xf32>
    %40 = vector.multi_reduction <add>, %39, %cst_13 [1] : vector<256x24xf32> to vector<256xf32>
    %41 = vector.shape_cast %40 : vector<256xf32> to vector<256x1xf32>
    %c0_14 = arith.constant 0 : index
    %42 = memref.load %arg7[%c0_14] : memref<1xf32, #tpu.memory_space<smem>>
    %43 = vector.broadcast %42 : f32 to vector<256x1xf32>
    %44 = arith.addf %41, %43 : vector<256x1xf32>
    %c0_15 = arith.constant 0 : index
    %c0_16 = arith.constant 0 : index
    %45 = vector.load %arg8[%c0_15, %c0_16] : memref<256x1xf32, #tpu.memory_space<vmem>>, vector<256x1xf32>
    tpu.vector_store %arg8[%c0_15, %c0_16], %44 {strides = array<i32>} : memref<256x1xf32, #tpu.memory_space<vmem>>, vector<256x1xf32>,
    return
  }
  func.func @transform_0(%arg0: i32) -> (i32, i32) {
    %c0_i32 = arith.constant 0 : i32
    %c0_i32_0 = arith.constant 0 : i32
    return %arg0, %c0_i32 : i32, i32
  }
  func.func @transform_1(%arg0: i32) -> (i32, i32) {
    %c0_i32 = arith.constant 0 : i32
    %c0_i32_0 = arith.constant 0 : i32
    %c0_i32_1 = arith.constant 0 : i32
    return %c0_i32, %c0_i32_0 : i32, i32
  }
  func.func @transform_2(%arg0: i32) -> (i32, i32) {
    %c0_i32 = arith.constant 0 : i32
    %c0_i32_0 = arith.constant 0 : i32
    %c0_i32_1 = arith.constant 0 : i32
    return %c0_i32, %c0_i32_0 : i32, i32
  }
  func.func @transform_3(%arg0: i32) -> (i32, i32) {
    %c0_i32 = arith.constant 0 : i32
    %c0_i32_0 = arith.constant 0 : i32
    %c0_i32_1 = arith.constant 0 : i32
    return %c0_i32, %c0_i32_0 : i32, i32
  }
  func.func @transform_4(%arg0: i32) -> (i32, i32) {
    %c0_i32 = arith.constant 0 : i32
    %c0_i32_0 = arith.constant 0 : i32
    %c0_i32_1 = arith.constant 0 : i32
    return %c0_i32, %c0_i32_0 : i32, i32
  }
  func.func @transform_5(%arg0: i32) -> (i32, i32) {
    %c0_i32 = arith.constant 0 : i32
    %c0_i32_0 = arith.constant 0 : i32
    %c0_i32_1 = arith.constant 0 : i32
    return %c0_i32, %c0_i32_0 : i32, i32
  }
  func.func @transform_6(%arg0: i32) -> i32 {
    %c0_i32 = arith.constant 0 : i32
    %c0_i32_0 = arith.constant 0 : i32
    return %c0_i32 : i32
  }
  func.func @transform_7(%arg0: i32) -> (i32, i32) {
    %c0_i32 = arith.constant 0 : i32
    %c0_i32_0 = arith.constant 0 : i32
    return %arg0, %c0_i32 : i32, i32
  }
}

</mosaic_0001>

<llo_original>
// kernel: critic_forward.1
$region0: #{critic_forward.1}
  #allocation0 [shape = 'u32[]', space=smem, size = 0x4, offset = 0x4, fixed_abs, tag = 'smem constant byte address 0x4 - core index']
  #allocation1 [shape = 'u32[144,128]{1,0:T(1,128)}', space=vmem, size = 0x12000, scoped, tag = 'internal scratch']
  #allocation2 [shape = 'f32[1]{0:T(128)S(6)}', space=smem, size = 0x200, scoped, tag = 'scoped memory for critic_forward.1']
  %s0 = inlined_call_operand.vmem [shape: f32[512,4], index: 0, kind: input, shape index: {}]
  %s1 = inlined_call_operand.vmem [shape: f32[4,24], index: 1, kind: input, shape index: {}]
  %s2 = inlined_call_operand.vmem [shape: f32[1,24], index: 2, kind: input, shape index: {}]
  %s3 = inlined_call_operand.vmem [shape: f32[24,24], index: 3, kind: input, shape index: {}]
  %s4 = inlined_call_operand.vmem [shape: f32[1,24], index: 4, kind: input, shape index: {}]
  %s5 = inlined_call_operand.vmem [shape: f32[1,24], index: 5, kind: input, shape index: {}]
  %s6 = inlined_call_operand.<no memory space> [shape: f32[1], index: 6, kind: input, shape index: {}]
  %s7 = inlined_call_operand.vmem [shape: f32[512,1], index: 7, kind: output, shape index: {}]
  %s8 = sld [smem:[#allocation0]]
  $region61: #{critic_forward.1} parent=0
    _
  %s10 = ssub.s32 1, %s8
  %s11 = scalar_select 0, %s10, %s8
  %12 = sst [smem:[#allocation2]] %s6
  loop: start=0, step=1, limit=4
  $region2: #{critic_forward.1} parent=0 // loop_pre_header
    _
  $region3: #{critic_forward.1} parent=0 // loop_header
    %s14 = sphi 0, %s18
    %p15 = scmp.ge.s32.totalorder %s14, 4
    %s24 = sphi 0, %s26
    %s27 = sphi 0, %s24
    %s28 = sphi 0, %s27
    %s44 = sphi 0, %s28
    %s48 = sphi 0, %s48
    %s50 = sphi 0, %s48
    %s51 = sphi 0, %s50
    %s65 = sphi 0, %s51
    %s69 = sphi 0, %s69
    %s71 = sphi 0, %s69
    %s72 = sphi 0, %s71
    %s86 = sphi 0, %s72
    %s90 = sphi 0, %s90
    %s92 = sphi 0, %s90
    %s93 = sphi 0, %s92
    %s107 = sphi 0, %s93
    %s111 = sphi 0, %s111
    %s113 = sphi 0, %s111
    %s114 = sphi 0, %s113
    %s128 = sphi 0, %s114
    %s132 = sphi 0, %s132
    %s134 = sphi 0, %s132
    %s135 = sphi 0, %s134
    %s149 = sphi 0, %s135
    %s153 = sphi 0, %s153
    %s155 = sphi 0, %s153
    %s156 = sphi 0, %s155
    %s170 = sphi 0, %s156
    %s176 = sphi 0, %s178
    %s179 = sphi 0, %s176
    %s180 = sphi 0, %s179
    %s196 = sphi 0, %s180
  $region4: #{critic_forward.1} parent=0 // loop_header_branch
    %17 = sbr.rel (%p15) target = $region8
  $region5: #{critic_forward.1} parent=0 // loop_body
    %s19 = ssub.s32 %s14, 1
    %s20 = ssub.s32 %s14, 2
    %s21 = sadd.s32 %s14, 1
    %s22 = ssub.s32 %s14, %s21
    %p23 = scmp.eq.s32.totalorder %s22, 0
    %s25 = sadd.s32 %s24, 1
    %s26 = scalar_select %p23, %s24, %s25
    %p29 = pneg %p23
    %p30 = scmp.eq.s32.totalorder %s14, 1
    %p31 = por %p29, %p30
    %p32 = scmp.ne.s32.totalorder %s24, %s27
    %p33 = scmp.eq.s32.totalorder %s14, 0
    %p34 = por %p32, %p33
    %p35 = scmp.ne.s32.totalorder %s24, %s27
    %p36 = scmp.eq.s32.totalorder %s19, 1
    %p37 = por %p35, %p36
    %p38 = scmp.ne.s32.totalorder %s27, %s28
    %p39 = scmp.eq.s32.totalorder %s19, 0
    %p40 = por %p38, %p39
    %p41 = scmp.ne.s32.totalorder %s27, %s28
    %p42 = scmp.eq.s32.totalorder %s20, 1
    %p43 = por %p41, %p42
    %p45 = scmp.ne.s32.totalorder %s28, %s44
    %p46 = scmp.eq.s32.totalorder %s20, 0
    %p47 = por %p45, %p46
    %s49 = sadd.s32 %s48, 1
    %p52 = scmp.eq.s32.totalorder %s14, 1
    %p53 = scmp.ne.s32.totalorder %s48, %s50
    %p54 = scmp.eq.s32.totalorder %s14, 0
    %p55 = por %p53, %p54
    %p56 = scmp.ne.s32.totalorder %s48, %s50
    %p57 = scmp.eq.s32.totalorder %s19, 1
    %p58 = por %p56, %p57
    %p59 = scmp.ne.s32.totalorder %s50, %s51
    %p60 = scmp.eq.s32.totalorder %s19, 0
    %p61 = por %p59, %p60
    %p62 = scmp.ne.s32.totalorder %s50, %s51
    %p63 = scmp.eq.s32.totalorder %s20, 1
    %p64 = por %p62, %p63
    %p66 = scmp.ne.s32.totalorder %s51, %s65
    %p67 = scmp.eq.s32.totalorder %s20, 0
    %p68 = por %p66, %p67
    %s70 = sadd.s32 %s69, 1
    %p73 = scmp.eq.s32.totalorder %s14, 1
    %p74 = scmp.ne.s32.totalorder %s69, %s71
    %p75 = scmp.eq.s32.totalorder %s14, 0
    %p76 = por %p74, %p75
    %p77 = scmp.ne.s32.totalorder %s69, %s71
    %p78 = scmp.eq.s32.totalorder %s19, 1
    %p79 = por %p77, %p78
    %p80 = scmp.ne.s32.totalorder %s71, %s72
    %p81 = scmp.eq.s32.totalorder %s19, 0
    %p82 = por %p80, %p81
    %p83 = scmp.ne.s32.totalorder %s71, %s72
    %p84 = scmp.eq.s32.totalorder %s20, 1
    %p85 = por %p83, %p84
    %p87 = scmp.ne.s32.totalorder %s72, %s86
    %p88 = scmp.eq.s32.totalorder %s20, 0
    %p89 = por %p87, %p88
    %s91 = sadd.s32 %s90, 1
    %p94 = scmp.eq.s32.totalorder %s14, 1
    %p95 = scmp.ne.s32.totalorder %s90, %s92
    %p96 = scmp.eq.s32.totalorder %s14, 0
    %p97 = por %p95, %p96
    %p98 = scmp.ne.s32.totalorder %s90, %s92
    %p99 = scmp.eq.s32.totalorder %s19, 1
    %p100 = por %p98, %p99
    %p101 = scmp.ne.s32.totalorder %s92, %s93
    %p102 = scmp.eq.s32.totalorder %s19, 0
    %p103 = por %p101, %p102
    %p104 = scmp.ne.s32.totalorder %s92, %s93
    %p105 = scmp.eq.s32.totalorder %s20, 1
    %p106 = por %p104, %p105
    %p108 = scmp.ne.s32.totalorder %s93, %s107
    %p109 = scmp.eq.s32.totalorder %s20, 0
    %p110 = por %p108, %p109
    %s112 = sadd.s32 %s111, 1
    %p115 = scmp.eq.s32.totalorder %s14, 1
    %p116 = scmp.ne.s32.totalorder %s111, %s113
    %p117 = scmp.eq.s32.totalorder %s14, 0
    %p118 = por %p116, %p117
    %p119 = scmp.ne.s32.totalorder %s111, %s113
    %p120 = scmp.eq.s32.totalorder %s19, 1
    %p121 = por %p119, %p120
    %p122 = scmp.ne.s32.totalorder %s113, %s114
    %p123 = scmp.eq.s32.totalorder %s19, 0
    %p124 = por %p122, %p123
    %p125 = scmp.ne.s32.totalorder %s113, %s114
    %p126 = scmp.eq.s32.totalorder %s20, 1
    %p127 = por %p125, %p126
    %p129 = scmp.ne.s32.totalorder %s114, %s128
    %p130 = scmp.eq.s32.totalorder %s20, 0
    %p131 = por %p129, %p130
    %s133 = sadd.s32 %s132, 1
    %p136 = scmp.eq.s32.totalorder %s14, 1
    %p137 = scmp.ne.s32.totalorder %s132, %s134
    %p138 = scmp.eq.s32.totalorder %s14, 0
    %p139 = por %p137, %p138
    %p140 = scmp.ne.s32.totalorder %s132, %s134
    %p141 = scmp.eq.s32.totalorder %s19, 1
    %p142 = por %p140, %p141
    %p143 = scmp.ne.s32.totalorder %s134, %s135
    %p144 = scmp.eq.s32.totalorder %s19, 0
    %p145 = por %p143, %p144
    %p146 = scmp.ne.s32.totalorder %s134, %s135
    %p147 = scmp.eq.s32.totalorder %s20, 1
    %p148 = por %p146, %p147
    %p150 = scmp.ne.s32.totalorder %s135, %s149
    %p151 = scmp.eq.s32.totalorder %s20, 0
    %p152 = por %p150, %p151
    %s154 = sadd.s32 %s153, 1
    %p157 = scmp.eq.s32.totalorder %s14, 1
    %p158 = scmp.ne.s32.totalorder %s153, %s155
    %p159 = scmp.eq.s32.totalorder %s14, 0
    %p160 = por %p158, %p159
    %p161 = scmp.ne.s32.totalorder %s153, %s155
    %p162 = scmp.eq.s32.totalorder %s19, 1
    %p163 = por %p161, %p162
    %p164 = scmp.ne.s32.totalorder %s155, %s156
    %p165 = scmp.eq.s32.totalorder %s19, 0
    %p166 = por %p164, %p165
    %p167 = scmp.ne.s32.totalorder %s155, %s156
    %p168 = scmp.eq.s32.totalorder %s20, 1
    %p169 = por %p167, %p168
    %p171 = scmp.ne.s32.totalorder %s156, %s170
    %p172 = scmp.eq.s32.totalorder %s20, 0
    %p173 = por %p171, %p172
    %s174 = ssub.s32 %s14, %s21
    %p175 = scmp.eq.s32.totalorder %s174, 0
    %s177 = sadd.s32 %s176, 1
    %s178 = scalar_select %p175, %s176, %s177
    %p181 = pneg %p175
    %p182 = scmp.eq.s32.totalorder %s14, 1
    %p183 = por %p181, %p182
    %p184 = scmp.ne.s32.totalorder %s176, %s179
    %p185 = scmp.eq.s32.totalorder %s14, 0
    %p186 = por %p184, %p185
    %p187 = scmp.ne.s32.totalorder %s176, %s179
    %p188 = scmp.eq.s32.totalorder %s19, 1
    %p189 = por %p187, %p188
    %p190 = scmp.ne.s32.totalorder %s179, %s180
    %p191 = scmp.eq.s32.totalorder %s19, 0
    %p192 = por %p190, %p191
    %p193 = scmp.ne.s32.totalorder %s179, %s180
    %p194 = scmp.eq.s32.totalorder %s20, 1
    %p195 = por %p193, %p194
    %p197 = scmp.ne.s32.totalorder %s180, %s196
    %p198 = scmp.eq.s32.totalorder %s20, 0
    %p199 = por %p197, %p198
    %p200 = scmp.le.s32.totalorder 1, %s14
    %p201 = scmp.lt.s32.totalorder %s14, 3
    %p202 = pnand %p200, %p201
    %p203 = pneg %p202
    // Predicated region
    $region9: #{critic_forward.1} parent=5 // pred_check
      _
    $region10: #{critic_forward.1} parent=5 // pred_check_branch
      %205 = sbr.rel (%p202) target = $region12
    $region11: #{critic_forward.1} parent=5 // pred_region
      %s206 = ssub.s32 %s14, 1
      // Predicated region
      $region13: #{critic_forward.1} parent=11 // pred_check
        %p207 = pneg %p61
      $region14: #{critic_forward.1} parent=11 // pred_check_branch
        %209 = sbr.rel (%p207) target = $region16
      $region15: #{critic_forward.1} parent=11 // pred_region
        _
      $region16: #{critic_forward.1} parent=11 // pred_fallthru
        _
      // Predicated region
      $region17: #{critic_forward.1} parent=11 // pred_check
        %p210 = pneg %p82
      $region18: #{critic_forward.1} parent=11 // pred_check_branch
        %212 = sbr.rel (%p210) target = $region20
      $region19: #{critic_forward.1} parent=11 // pred_region
        _
      $region20: #{critic_forward.1} parent=11 // pred_fallthru
        _
      // Predicated region
      $region21: #{critic_forward.1} parent=11 // pred_check
        %p213 = pneg %p103
      $region22: #{critic_forward.1} parent=11 // pred_check_branch
        %215 = sbr.rel (%p213) target = $region24
      $region23: #{critic_forward.1} parent=11 // pred_region
        _
      $region24: #{critic_forward.1} parent=11 // pred_fallthru
        _
      // Predicated region
      $region25: #{critic_forward.1} parent=11 // pred_check
        %p216 = pneg %p124
      $region26: #{critic_forward.1} parent=11 // pred_check_branch
        %218 = sbr.rel (%p216) target = $region28
      $region27: #{critic_forward.1} parent=11 // pred_region
        _
      $region28: #{critic_forward.1} parent=11 // pred_fallthru
        _
      // Predicated region
      $region29: #{critic_forward.1} parent=11 // pred_check
        %p219 = pneg %p145
      $region30: #{critic_forward.1} parent=11 // pred_check_branch
        %221 = sbr.rel (%p219) target = $region32
      $region31: #{critic_forward.1} parent=11 // pred_region
        _
      $region32: #{critic_forward.1} parent=11 // pred_fallthru
        _
      // Predicated region
      $region33: #{critic_forward.1} parent=11 // pred_check
        %p222 = pneg %p166
      $region34: #{critic_forward.1} parent=11 // pred_check_branch
        %224 = sbr.rel (%p222) target = $region36
      $region35: #{critic_forward.1} parent=11 // pred_region
        _
      $region36: #{critic_forward.1} parent=11 // pred_fallthru
        _
    $region12: #{critic_forward.1} parent=5 // pred_fallthru
      _
    %p225 = scmp.lt.s32.totalorder %s14, 2
    // Predicated region
    $region37: #{critic_forward.1} parent=5 // pred_check
      %p226 = pneg %p225
    $region38: #{critic_forward.1} parent=5 // pred_check_branch
      %228 = sbr.rel (%p226) target = $region40
    $region39: #{critic_forward.1} parent=5 // pred_region
      // Predicated region
      $region41: #{critic_forward.1} parent=39 // pred_check
        %p229 = pneg %p34
      $region42: #{critic_forward.1} parent=39 // pred_check_branch
        %231 = sbr.rel (%p229) target = $region44
      $region43: #{critic_forward.1} parent=39 // pred_region
        %s232 = smul.u32 32, %s14
        %p233 = scmp.lt.s32.totalorder %s232, 63
        %s234 = scalar_select %p233, %s232, 63
        %s235 = smul.addr %s234, 8
        %s236 = scalar_lea.vmem %s0, %s235
        %s237 = smul.u32 32, %s14
      $region44: #{critic_forward.1} parent=39 // pred_fallthru
        _
    $region40: #{critic_forward.1} parent=5 // pred_fallthru
      _
    %p238 = scmp.le.s32.totalorder 1, %s14
    %p239 = scmp.lt.s32.totalorder %s14, 3
    %p240 = pnand %p238, %p239
    %p241 = pneg %p240
    // Predicated region
    $region45: #{critic_forward.1} parent=5 // pred_check
      _
    $region46: #{critic_forward.1} parent=5 // pred_check_branch
      %243 = sbr.rel (%p240) target = $region48
    $region47: #{critic_forward.1} parent=5 // pred_region
      %s244 = ssub.s32 %s14, 1
      %s245 = smul.u32 32, %s19
      %p246 = scmp.lt.s32.totalorder %s245, 63
      %s247 = scalar_select %p246, %s245, 63
      %s248 = smul.addr %s247, 8
      %s249 = scalar_lea.vmem %s0, %s248
      %p250 = pneg %p40
      %p251 = pneg %p37
      %p252 = pneg %p61
      %p253 = pneg %p58
      %p254 = pneg %p82
      %p255 = pneg %p79
      %p256 = pneg %p103
      %p257 = pneg %p100
      %p258 = pneg %p124
      %p259 = pneg %p121
      %p260 = pneg %p145
      %p261 = pneg %p142
      %p262 = pneg %p166
      %p263 = pneg %p163
      %p264 = pneg %p192
      %p265 = pneg %p189
      %s266 = smul.u32 32, %s19
      %p267 = scmp.lt.s32.totalorder %s266, 63
      %s268 = scalar_select %p267, %s266, 63
      %s269 = smul.addr %s268, 8
      %s270 = scalar_lea.vmem %s7, %s269
      %s271 = smul.u32 32, %s19
      %p272 = scmp.lt.s32.totalorder %s271, 63
      %s273 = scalar_select %p272, %s271, 63
      %s274 = smul.addr %s273, 8
      %s275 = scalar_lea.vmem %s0, %s274
      %s276 = smul.u32 32, %s19
      %s277 = smul.u32 32, %s19
      %p278 = scmp.lt.s32.totalorder %s277, 63
      %s279 = scalar_select %p278, %s277, 63
      %s280 = smul.addr %s279, 8
      %s281 = scalar_lea.vmem %s7, %s280
      %s282 = smul.u32 32, %s19
      %v283 = vld [vmem:[%s275] sm:$0xff]
      %v284 = vld [vmem:[%s275 + $0x8] sm:$0xff]
      %v285 = vld [vmem:[%s275 + $0x10] sm:$0xff]
      %v286 = vld [vmem:[%s275 + $0x18] sm:$0xff]
      %v287 = vld [vmem:[%s275 + $0x20] sm:$0xff]
      %v288 = vld [vmem:[%s275 + $0x28] sm:$0xff]
      %v289 = vld [vmem:[%s275 + $0x30] sm:$0xff]
      %v290 = vld [vmem:[%s275 + $0x38] sm:$0xff]
      %v291 = vld [vmem:[%s275 + $0x40] sm:$0xff]
      %v292 = vld [vmem:[%s275 + $0x48] sm:$0xff]
      %v293 = vld [vmem:[%s275 + $0x50] sm:$0xff]
      %v294 = vld [vmem:[%s275 + $0x58] sm:$0xff]
      %v295 = vld [vmem:[%s275 + $0x60] sm:$0xff]
      %v296 = vld [vmem:[%s275 + $0x68] sm:$0xff]
      %v297 = vld [vmem:[%s275 + $0x70] sm:$0xff]
      %v298 = vld [vmem:[%s275 + $0x78] sm:$0xff]
      %v299 = vld [vmem:[%s275 + $0x80] sm:$0xff]
      %v300 = vld [vmem:[%s275 + $0x88] sm:$0xff]
      %v301 = vld [vmem:[%s275 + $0x90] sm:$0xff]
      %v302 = vld [vmem:[%s275 + $0x98] sm:$0xff]
      %v303 = vld [vmem:[%s275 + $0xa0] sm:$0xff]
      %v304 = vld [vmem:[%s275 + $0xa8] sm:$0xff]
      %v305 = vld [vmem:[%s275 + $0xb0] sm:$0xff]
      %v306 = vld [vmem:[%s275 + $0xb8] sm:$0xff]
      %v307 = vld [vmem:[%s275 + $0xc0] sm:$0xff]
      %v308 = vld [vmem:[%s275 + $0xc8] sm:$0xff]
      %v309 = vld [vmem:[%s275 + $0xd0] sm:$0xff]
      %v310 = vld [vmem:[%s275 + $0xd8] sm:$0xff]
      %v311 = vld [vmem:[%s275 + $0xe0] sm:$0xff]
      %v312 = vld [vmem:[%s275 + $0xe8] sm:$0xff]
      %v313 = vld [vmem:[%s275 + $0xf0] sm:$0xff]
      %v314 = vld [vmem:[%s275 + $0xf8] sm:$0xff]
      %v315 = vld [vmem:[%s1] sm:$0xf]
      %317 = vset.pattern.permute.xlu0 0
      %318 = vperm.xlu0 %317, %v283
      %v319 = vpop.permute.xlu0 %318
      %322 = vset.pattern.permute.xlu0 0
      %323 = vperm.xlu0 %322, %v284
      %v324 = vpop.permute.xlu0 %323
      %327 = vset.pattern.permute.xlu0 0
      %328 = vperm.xlu0 %327, %v285
      %v329 = vpop.permute.xlu0 %328
      %332 = vset.pattern.permute.xlu0 0
      %333 = vperm.xlu0 %332, %v286
      %v334 = vpop.permute.xlu0 %333
      %337 = vset.pattern.permute.xlu0 0
      %338 = vperm.xlu0 %337, %v287
      %v339 = vpop.permute.xlu0 %338
      %342 = vset.pattern.permute.xlu0 0
      %343 = vperm.xlu0 %342, %v288
      %v344 = vpop.permute.xlu0 %343
      %347 = vset.pattern.permute.xlu0 0
      %348 = vperm.xlu0 %347, %v289
      %v349 = vpop.permute.xlu0 %348
      %352 = vset.pattern.permute.xlu0 0
      %353 = vperm.xlu0 %352, %v290
      %v354 = vpop.permute.xlu0 %353
      %357 = vset.pattern.permute.xlu0 0
      %358 = vperm.xlu0 %357, %v291
      %v359 = vpop.permute.xlu0 %358
      %362 = vset.pattern.permute.xlu0 0
      %363 = vperm.xlu0 %362, %v292
      %v364 = vpop.permute.xlu0 %363
      %367 = vset.pattern.permute.xlu0 0
      %368 = vperm.xlu0 %367, %v293
      %v369 = vpop.permute.xlu0 %368
      %372 = vset.pattern.permute.xlu0 0
      %373 = vperm.xlu0 %372, %v294
      %v374 = vpop.permute.xlu0 %373
      %377 = vset.pattern.permute.xlu0 0
      %378 = vperm.xlu0 %377, %v295
      %v379 = vpop.permute.xlu0 %378
      %382 = vset.pattern.permute.xlu0 0
      %383 = vperm.xlu0 %382, %v296
      %v384 = vpop.permute.xlu0 %383
      %387 = vset.pattern.permute.xlu0 0
      %388 = vperm.xlu0 %387, %v297
      %v389 = vpop.permute.xlu0 %388
      %392 = vset.pattern.permute.xlu0 0
      %393 = vperm.xlu0 %392, %v298
      %v394 = vpop.permute.xlu0 %393
      %397 = vset.pattern.permute.xlu0 0
      %398 = vperm.xlu0 %397, %v299
      %v399 = vpop.permute.xlu0 %398
      %402 = vset.pattern.permute.xlu0 0
      %403 = vperm.xlu0 %402, %v300
      %v404 = vpop.permute.xlu0 %403
      %407 = vset.pattern.permute.xlu0 0
      %408 = vperm.xlu0 %407, %v301
      %v409 = vpop.permute.xlu0 %408
      %412 = vset.pattern.permute.xlu0 0
      %413 = vperm.xlu0 %412, %v302
      %v414 = vpop.permute.xlu0 %413
      %417 = vset.pattern.permute.xlu0 0
      %418 = vperm.xlu0 %417, %v303
      %v419 = vpop.permute.xlu0 %418
      %422 = vset.pattern.permute.xlu0 0
      %423 = vperm.xlu0 %422, %v304
      %v424 = vpop.permute.xlu0 %423
      %427 = vset.pattern.permute.xlu0 0
      %428 = vperm.xlu0 %427, %v305
      %v429 = vpop.permute.xlu0 %428
      %432 = vset.pattern.permute.xlu0 0
      %433 = vperm.xlu0 %432, %v306
      %v434 = vpop.permute.xlu0 %433
      %437 = vset.pattern.permute.xlu0 0
      %438 = vperm.xlu0 %437, %v307
      %v439 = vpop.permute.xlu0 %438
      %442 = vset.pattern.permute.xlu0 0
      %443 = vperm.xlu0 %442, %v308
      %v444 = vpop.permute.xlu0 %443
      %447 = vset.pattern.permute.xlu0 0
      %448 = vperm.xlu0 %447, %v309
      %v449 = vpop.permute.xlu0 %448
      %452 = vset.pattern.permute.xlu0 0
      %453 = vperm.xlu0 %452, %v310
      %v454 = vpop.permute.xlu0 %453
      %457 = vset.pattern.permute.xlu0 0
      %458 = vperm.xlu0 %457, %v311
      %v459 = vpop.permute.xlu0 %458
      %462 = vset.pattern.permute.xlu0 0
      %463 = vperm.xlu0 %462, %v312
      %v464 = vpop.permute.xlu0 %463
      %467 = vset.pattern.permute.xlu0 0
      %468 = vperm.xlu0 %467, %v313
      %v469 = vpop.permute.xlu0 %468
      %472 = vset.pattern.permute.xlu0 0
      %473 = vperm.xlu0 %472, %v314
      %v474 = vpop.permute.xlu0 %473
      %v476 = vlaneseq
      %v477 = vshrl.u32 %v476, 7
      %v478 = vsub.s32 0, %v477
      %v479 = vrot.slane %v315, %v478
      %v480 = vmul.f32 %v319, %v479
      %v481 = vmul.f32 %v324, %v479
      %v482 = vmul.f32 %v329, %v479
      %v483 = vmul.f32 %v334, %v479
      %v484 = vmul.f32 %v339, %v479
      %v485 = vmul.f32 %v344, %v479
      %v486 = vmul.f32 %v349, %v479
      %v487 = vmul.f32 %v354, %v479
      %v488 = vmul.f32 %v359, %v479
      %v489 = vmul.f32 %v364, %v479
      %v490 = vmul.f32 %v369, %v479
      %v491 = vmul.f32 %v374, %v479
      %v492 = vmul.f32 %v379, %v479
      %v493 = vmul.f32 %v384, %v479
      %v494 = vmul.f32 %v389, %v479
      %v495 = vmul.f32 %v394, %v479
      %v496 = vmul.f32 %v399, %v479
      %v497 = vmul.f32 %v404, %v479
      %v498 = vmul.f32 %v409, %v479
      %v499 = vmul.f32 %v414, %v479
      %v500 = vmul.f32 %v419, %v479
      %v501 = vmul.f32 %v424, %v479
      %v502 = vmul.f32 %v429, %v479
      %v503 = vmul.f32 %v434, %v479
      %v504 = vmul.f32 %v439, %v479
      %v505 = vmul.f32 %v444, %v479
      %v506 = vmul.f32 %v449, %v479
      %v507 = vmul.f32 %v454, %v479
      %v508 = vmul.f32 %v459, %v479
      %v509 = vmul.f32 %v464, %v479
      %v510 = vmul.f32 %v469, %v479
      %v511 = vmul.f32 %v474, %v479
      %512 = vset.pattern.permute.xlu0 1
      %513 = vperm.xlu0 %512, %v283
      %v514 = vpop.permute.xlu0 %513
      %516 = vset.pattern.permute.xlu0 1
      %517 = vperm.xlu0 %516, %v284
      %v518 = vpop.permute.xlu0 %517
      %520 = vset.pattern.permute.xlu0 1
      %521 = vperm.xlu0 %520, %v285
      %v522 = vpop.permute.xlu0 %521
      %524 = vset.pattern.permute.xlu0 1
      %525 = vperm.xlu0 %524, %v286
      %v526 = vpop.permute.xlu0 %525
      %528 = vset.pattern.permute.xlu0 1
      %529 = vperm.xlu0 %528, %v287
      %v530 = vpop.permute.xlu0 %529
      %532 = vset.pattern.permute.xlu0 1
      %533 = vperm.xlu0 %532, %v288
      %v534 = vpop.permute.xlu0 %533
      %536 = vset.pattern.permute.xlu0 1
      %537 = vperm.xlu0 %536, %v289
      %v538 = vpop.permute.xlu0 %537
      %540 = vset.pattern.permute.xlu0 1
      %541 = vperm.xlu0 %540, %v290
      %v542 = vpop.permute.xlu0 %541
      %544 = vset.pattern.permute.xlu0 1
      %545 = vperm.xlu0 %544, %v291
      %v546 = vpop.permute.xlu0 %545
      %548 = vset.pattern.permute.xlu0 1
      %549 = vperm.xlu0 %548, %v292
      %v550 = vpop.permute.xlu0 %549
      %552 = vset.pattern.permute.xlu0 1
      %553 = vperm.xlu0 %552, %v293
      %v554 = vpop.permute.xlu0 %553
      %556 = vset.pattern.permute.xlu0 1
      %557 = vperm.xlu0 %556, %v294
      %v558 = vpop.permute.xlu0 %557
      %560 = vset.pattern.permute.xlu0 1
      %561 = vperm.xlu0 %560, %v295
      %v562 = vpop.permute.xlu0 %561
      %564 = vset.pattern.permute.xlu0 1
      %565 = vperm.xlu0 %564, %v296
      %v566 = vpop.permute.xlu0 %565
      %568 = vset.pattern.permute.xlu0 1
      %569 = vperm.xlu0 %568, %v297
      %v570 = vpop.permute.xlu0 %569
      %572 = vset.pattern.permute.xlu0 1
      %573 = vperm.xlu0 %572, %v298
      %v574 = vpop.permute.xlu0 %573
      %576 = vset.pattern.permute.xlu0 1
      %577 = vperm.xlu0 %576, %v299
      %v578 = vpop.permute.xlu0 %577
      %580 = vset.pattern.permute.xlu0 1
      %581 = vperm.xlu0 %580, %v300
      %v582 = vpop.permute.xlu0 %581
      %584 = vset.pattern.permute.xlu0 1
      %585 = vperm.xlu0 %584, %v301
      %v586 = vpop.permute.xlu0 %585
      %588 = vset.pattern.permute.xlu0 1
      %589 = vperm.xlu0 %588, %v302
      %v590 = vpop.permute.xlu0 %589
      %592 = vset.pattern.permute.xlu0 1
      %593 = vperm.xlu0 %592, %v303
      %v594 = vpop.permute.xlu0 %593
      %596 = vset.pattern.permute.xlu0 1
      %597 = vperm.xlu0 %596, %v304
      %v598 = vpop.permute.xlu0 %597
      %600 = vset.pattern.permute.xlu0 1
      %601 = vperm.xlu0 %600, %v305
      %v602 = vpop.permute.xlu0 %601
      %604 = vset.pattern.permute.xlu0 1
      %605 = vperm.xlu0 %604, %v306
      %v606 = vpop.permute.xlu0 %605
      %608 = vset.pattern.permute.xlu0 1
      %609 = vperm.xlu0 %608, %v307
      %v610 = vpop.permute.xlu0 %609
      %612 = vset.pattern.permute.xlu0 1
      %613 = vperm.xlu0 %612, %v308
      %v614 = vpop.permute.xlu0 %613
      %616 = vset.pattern.permute.xlu0 1
      %617 = vperm.xlu0 %616, %v309
      %v618 = vpop.permute.xlu0 %617
      %620 = vset.pattern.permute.xlu0 1
      %621 = vperm.xlu0 %620, %v310
      %v622 = vpop.permute.xlu0 %621
      %624 = vset.pattern.permute.xlu0 1
      %625 = vperm.xlu0 %624, %v311
      %v626 = vpop.permute.xlu0 %625
      %628 = vset.pattern.permute.xlu0 1
      %629 = vperm.xlu0 %628, %v312
      %v630 = vpop.permute.xlu0 %629
      %632 = vset.pattern.permute.xlu0 1
      %633 = vperm.xlu0 %632, %v313
      %v634 = vpop.permute.xlu0 %633
      %636 = vset.pattern.permute.xlu0 1
      %637 = vperm.xlu0 %636, %v314
      %v638 = vpop.permute.xlu0 %637
      %v640 = vlaneseq
      %v641 = vshrl.u32 %v640, 7
      %v642 = vsub.s32 1, %v641
      %v643 = vrot.slane %v315, %v642
      %v644 = vmul.f32 %v514, %v643
      %v645 = vmul.f32 %v518, %v643
      %v646 = vmul.f32 %v522, %v643
      %v647 = vmul.f32 %v526, %v643
      %v648 = vmul.f32 %v530, %v643
      %v649 = vmul.f32 %v534, %v643
      %v650 = vmul.f32 %v538, %v643
      %v651 = vmul.f32 %v542, %v643
      %v652 = vmul.f32 %v546, %v643
      %v653 = vmul.f32 %v550, %v643
      %v654 = vmul.f32 %v554, %v643
      %v655 = vmul.f32 %v558, %v643
      %v656 = vmul.f32 %v562, %v643
      %v657 = vmul.f32 %v566, %v643
      %v658 = vmul.f32 %v570, %v643
      %v659 = vmul.f32 %v574, %v643
      %v660 = vmul.f32 %v578, %v643
      %v661 = vmul.f32 %v582, %v643
      %v662 = vmul.f32 %v586, %v643
      %v663 = vmul.f32 %v590, %v643
      %v664 = vmul.f32 %v594, %v643
      %v665 = vmul.f32 %v598, %v643
      %v666 = vmul.f32 %v602, %v643
      %v667 = vmul.f32 %v606, %v643
      %v668 = vmul.f32 %v610, %v643
      %v669 = vmul.f32 %v614, %v643
      %v670 = vmul.f32 %v618, %v643
      %v671 = vmul.f32 %v622, %v643
      %v672 = vmul.f32 %v626, %v643
      %v673 = vmul.f32 %v630, %v643
      %v674 = vmul.f32 %v634, %v643
      %v675 = vmul.f32 %v638, %v643
      %v676 = vadd.f32 %v480, %v644
      %v677 = vadd.f32 %v481, %v645
      %v678 = vadd.f32 %v482, %v646
      %v679 = vadd.f32 %v483, %v647
      %v680 = vadd.f32 %v484, %v648
      %v681 = vadd.f32 %v485, %v649
      %v682 = vadd.f32 %v486, %v650
      %v683 = vadd.f32 %v487, %v651
      %v684 = vadd.f32 %v488, %v652
      %v685 = vadd.f32 %v489, %v653
      %v686 = vadd.f32 %v490, %v654
      %v687 = vadd.f32 %v491, %v655
      %v688 = vadd.f32 %v492, %v656
      %v689 = vadd.f32 %v493, %v657
      %v690 = vadd.f32 %v494, %v658
      %v691 = vadd.f32 %v495, %v659
      %v692 = vadd.f32 %v496, %v660
      %v693 = vadd.f32 %v497, %v661
      %v694 = vadd.f32 %v498, %v662
      %v695 = vadd.f32 %v499, %v663
      %v696 = vadd.f32 %v500, %v664
      %v697 = vadd.f32 %v501, %v665
      %v698 = vadd.f32 %v502, %v666
      %v699 = vadd.f32 %v503, %v667
      %v700 = vadd.f32 %v504, %v668
      %v701 = vadd.f32 %v505, %v669
      %v702 = vadd.f32 %v506, %v670
      %v703 = vadd.f32 %v507, %v671
      %v704 = vadd.f32 %v508, %v672
      %v705 = vadd.f32 %v509, %v673
      %v706 = vadd.f32 %v510, %v674
      %v707 = vadd.f32 %v511, %v675
      %708 = vset.pattern.permute.xlu0 2
      %709 = vperm.xlu0 %708, %v283
      %v710 = vpop.permute.xlu0 %709
      %712 = vset.pattern.permute.xlu0 2
      %713 = vperm.xlu0 %712, %v284
      %v714 = vpop.permute.xlu0 %713
      %716 = vset.pattern.permute.xlu0 2
      %717 = vperm.xlu0 %716, %v285
      %v718 = vpop.permute.xlu0 %717
      %720 = vset.pattern.permute.xlu0 2
      %721 = vperm.xlu0 %720, %v286
      %v722 = vpop.permute.xlu0 %721
      %724 = vset.pattern.permute.xlu0 2
      %725 = vperm.xlu0 %724, %v287
      %v726 = vpop.permute.xlu0 %725
      %728 = vset.pattern.permute.xlu0 2
      %729 = vperm.xlu0 %728, %v288
      %v730 = vpop.permute.xlu0 %729
      %732 = vset.pattern.permute.xlu0 2
      %733 = vperm.xlu0 %732, %v289
      %v734 = vpop.permute.xlu0 %733
      %736 = vset.pattern.permute.xlu0 2
      %737 = vperm.xlu0 %736, %v290
      %v738 = vpop.permute.xlu0 %737
      %740 = vset.pattern.permute.xlu0 2
      %741 = vperm.xlu0 %740, %v291
      %v742 = vpop.permute.xlu0 %741
      %744 = vset.pattern.permute.xlu0 2
      %745 = vperm.xlu0 %744, %v292
      %v746 = vpop.permute.xlu0 %745
      %748 = vset.pattern.permute.xlu0 2
      %749 = vperm.xlu0 %748, %v293
      %v750 = vpop.permute.xlu0 %749
      %752 = vset.pattern.permute.xlu0 2
      %753 = vperm.xlu0 %752, %v294
      %v754 = vpop.permute.xlu0 %753
      %756 = vset.pattern.permute.xlu0 2
      %757 = vperm.xlu0 %756, %v295
      %v758 = vpop.permute.xlu0 %757
      %760 = vset.pattern.permute.xlu0 2
      %761 = vperm.xlu0 %760, %v296
      %v762 = vpop.permute.xlu0 %761
      %764 = vset.pattern.permute.xlu0 2
      %765 = vperm.xlu0 %764, %v297
      %v766 = vpop.permute.xlu0 %765
      %768 = vset.pattern.permute.xlu0 2
      %769 = vperm.xlu0 %768, %v298
      %v770 = vpop.permute.xlu0 %769
      %772 = vset.pattern.permute.xlu0 2
      %773 = vperm.xlu0 %772, %v299
      %v774 = vpop.permute.xlu0 %773
      %776 = vset.pattern.permute.xlu0 2
      %777 = vperm.xlu0 %776, %v300
      %v778 = vpop.permute.xlu0 %777
      %780 = vset.pattern.permute.xlu0 2
      %781 = vperm.xlu0 %780, %v301
      %v782 = vpop.permute.xlu0 %781
      %784 = vset.pattern.permute.xlu0 2
      %785 = vperm.xlu0 %784, %v302
      %v786 = vpop.permute.xlu0 %785
      %788 = vset.pattern.permute.xlu0 2
      %789 = vperm.xlu0 %788, %v303
      %v790 = vpop.permute.xlu0 %789
      %792 = vset.pattern.permute.xlu0 2
      %793 = vperm.xlu0 %792, %v304
      %v794 = vpop.permute.xlu0 %793
      %796 = vset.pattern.permute.xlu0 2
      %797 = vperm.xlu0 %796, %v305
      %v798 = vpop.permute.xlu0 %797
      %800 = vset.pattern.permute.xlu0 2
      %801 = vperm.xlu0 %800, %v306
      %v802 = vpop.permute.xlu0 %801
      %804 = vset.pattern.permute.xlu0 2
      %805 = vperm.xlu0 %804, %v307
      %v806 = vpop.permute.xlu0 %805
      %808 = vset.pattern.permute.xlu0 2
      %809 = vperm.xlu0 %808, %v308
      %v810 = vpop.permute.xlu0 %809
      %812 = vset.pattern.permute.xlu0 2
      %813 = vperm.xlu0 %812, %v309
      %v814 = vpop.permute.xlu0 %813
      %816 = vset.pattern.permute.xlu0 2
      %817 = vperm.xlu0 %816, %v310
      %v818 = vpop.permute.xlu0 %817
      %820 = vset.pattern.permute.xlu0 2
      %821 = vperm.xlu0 %820, %v311
      %v822 = vpop.permute.xlu0 %821
      %824 = vset.pattern.permute.xlu0 2
      %825 = vperm.xlu0 %824, %v312
      %v826 = vpop.permute.xlu0 %825
      %828 = vset.pattern.permute.xlu0 2
      %829 = vperm.xlu0 %828, %v313
      %v830 = vpop.permute.xlu0 %829
      %832 = vset.pattern.permute.xlu0 2
      %833 = vperm.xlu0 %832, %v314
      %v834 = vpop.permute.xlu0 %833
      %v836 = vlaneseq
      %v837 = vshrl.u32 %v836, 7
      %v838 = vsub.s32 2, %v837
      %v839 = vrot.slane %v315, %v838
      %v840 = vmul.f32 %v710, %v839
      %v841 = vmul.f32 %v714, %v839
      %v842 = vmul.f32 %v718, %v839
      %v843 = vmul.f32 %v722, %v839
      %v844 = vmul.f32 %v726, %v839
      %v845 = vmul.f32 %v730, %v839
      %v846 = vmul.f32 %v734, %v839
      %v847 = vmul.f32 %v738, %v839
      %v848 = vmul.f32 %v742, %v839
      %v849 = vmul.f32 %v746, %v839
      %v850 = vmul.f32 %v750, %v839
      %v851 = vmul.f32 %v754, %v839
      %v852 = vmul.f32 %v758, %v839
      %v853 = vmul.f32 %v762, %v839
      %v854 = vmul.f32 %v766, %v839
      %v855 = vmul.f32 %v770, %v839
      %v856 = vmul.f32 %v774, %v839
      %v857 = vmul.f32 %v778, %v839
      %v858 = vmul.f32 %v782, %v839
      %v859 = vmul.f32 %v786, %v839
      %v860 = vmul.f32 %v790, %v839
      %v861 = vmul.f32 %v794, %v839
      %v862 = vmul.f32 %v798, %v839
      %v863 = vmul.f32 %v802, %v839
      %v864 = vmul.f32 %v806, %v839
      %v865 = vmul.f32 %v810, %v839
      %v866 = vmul.f32 %v814, %v839
      %v867 = vmul.f32 %v818, %v839
      %v868 = vmul.f32 %v822, %v839
      %v869 = vmul.f32 %v826, %v839
      %v870 = vmul.f32 %v830, %v839
      %v871 = vmul.f32 %v834, %v839
      %v872 = vadd.f32 %v676, %v840
      %v873 = vadd.f32 %v677, %v841
      %v874 = vadd.f32 %v678, %v842
      %v875 = vadd.f32 %v679, %v843
      %v876 = vadd.f32 %v680, %v844
      %v877 = vadd.f32 %v681, %v845
      %v878 = vadd.f32 %v682, %v846
      %v879 = vadd.f32 %v683, %v847
      %v880 = vadd.f32 %v684, %v848
      %v881 = vadd.f32 %v685, %v849
      %v882 = vadd.f32 %v686, %v850
      %v883 = vadd.f32 %v687, %v851
      %v884 = vadd.f32 %v688, %v852
      %v885 = vadd.f32 %v689, %v853
      %v886 = vadd.f32 %v690, %v854
      %v887 = vadd.f32 %v691, %v855
      %v888 = vadd.f32 %v692, %v856
      %v889 = vadd.f32 %v693, %v857
      %v890 = vadd.f32 %v694, %v858
      %v891 = vadd.f32 %v695, %v859
      %v892 = vadd.f32 %v696, %v860
      %v893 = vadd.f32 %v697, %v861
      %v894 = vadd.f32 %v698, %v862
      %v895 = vadd.f32 %v699, %v863
      %v896 = vadd.f32 %v700, %v864
      %v897 = vadd.f32 %v701, %v865
      %v898 = vadd.f32 %v702, %v866
      %v899 = vadd.f32 %v703, %v867
      %v900 = vadd.f32 %v704, %v868
      %v901 = vadd.f32 %v705, %v869
      %v902 = vadd.f32 %v706, %v870
      %v903 = vadd.f32 %v707, %v871
      %904 = vset.pattern.permute.xlu0 3
      %905 = vperm.xlu0 %904, %v283
      %v906 = vpop.permute.xlu0 %905
      %908 = vset.pattern.permute.xlu0 3
      %909 = vperm.xlu0 %908, %v284
      %v910 = vpop.permute.xlu0 %909
      %912 = vset.pattern.permute.xlu0 3
      %913 = vperm.xlu0 %912, %v285
      %v914 = vpop.permute.xlu0 %913
      %916 = vset.pattern.permute.xlu0 3
      %917 = vperm.xlu0 %916, %v286
      %v918 = vpop.permute.xlu0 %917
      %920 = vset.pattern.permute.xlu0 3
      %921 = vperm.xlu0 %920, %v287
      %v922 = vpop.permute.xlu0 %921
      %924 = vset.pattern.permute.xlu0 3
      %925 = vperm.xlu0 %924, %v288
      %v926 = vpop.permute.xlu0 %925
      %928 = vset.pattern.permute.xlu0 3
      %929 = vperm.xlu0 %928, %v289
      %v930 = vpop.permute.xlu0 %929
      %932 = vset.pattern.permute.xlu0 3
      %933 = vperm.xlu0 %932, %v290
      %v934 = vpop.permute.xlu0 %933
      %936 = vset.pattern.permute.xlu0 3
      %937 = vperm.xlu0 %936, %v291
      %v938 = vpop.permute.xlu0 %937
      %940 = vset.pattern.permute.xlu0 3
      %941 = vperm.xlu0 %940, %v292
      %v942 = vpop.permute.xlu0 %941
      %944 = vset.pattern.permute.xlu0 3
      %945 = vperm.xlu0 %944, %v293
      %v946 = vpop.permute.xlu0 %945
      %948 = vset.pattern.permute.xlu0 3
      %949 = vperm.xlu0 %948, %v294
      %v950 = vpop.permute.xlu0 %949
      %952 = vset.pattern.permute.xlu0 3
      %953 = vperm.xlu0 %952, %v295
      %v954 = vpop.permute.xlu0 %953
      %956 = vset.pattern.permute.xlu0 3
      %957 = vperm.xlu0 %956, %v296
      %v958 = vpop.permute.xlu0 %957
      %960 = vset.pattern.permute.xlu0 3
      %961 = vperm.xlu0 %960, %v297
      %v962 = vpop.permute.xlu0 %961
      %964 = vset.pattern.permute.xlu0 3
      %965 = vperm.xlu0 %964, %v298
      %v966 = vpop.permute.xlu0 %965
      %968 = vset.pattern.permute.xlu0 3
      %969 = vperm.xlu0 %968, %v299
      %v970 = vpop.permute.xlu0 %969
      %972 = vset.pattern.permute.xlu0 3
      %973 = vperm.xlu0 %972, %v300
      %v974 = vpop.permute.xlu0 %973
      %976 = vset.pattern.permute.xlu0 3
      %977 = vperm.xlu0 %976, %v301
      %v978 = vpop.permute.xlu0 %977
      %980 = vset.pattern.permute.xlu0 3
      %981 = vperm.xlu0 %980, %v302
      %v982 = vpop.permute.xlu0 %981
      %984 = vset.pattern.permute.xlu0 3
      %985 = vperm.xlu0 %984, %v303
      %v986 = vpop.permute.xlu0 %985
      %988 = vset.pattern.permute.xlu0 3
      %989 = vperm.xlu0 %988, %v304
      %v990 = vpop.permute.xlu0 %989
      %992 = vset.pattern.permute.xlu0 3
      %993 = vperm.xlu0 %992, %v305
      %v994 = vpop.permute.xlu0 %993
      %996 = vset.pattern.permute.xlu0 3
      %997 = vperm.xlu0 %996, %v306
      %v998 = vpop.permute.xlu0 %997
      %1000 = vset.pattern.permute.xlu0 3
      %1001 = vperm.xlu0 %1000, %v307
      %v1002 = vpop.permute.xlu0 %1001
      %1004 = vset.pattern.permute.xlu0 3
      %1005 = vperm.xlu0 %1004, %v308
      %v1006 = vpop.permute.xlu0 %1005
      %1008 = vset.pattern.permute.xlu0 3
      %1009 = vperm.xlu0 %1008, %v309
      %v1010 = vpop.permute.xlu0 %1009
      %1012 = vset.pattern.permute.xlu0 3
      %1013 = vperm.xlu0 %1012, %v310
      %v1014 = vpop.permute.xlu0 %1013
      %1016 = vset.pattern.permute.xlu0 3
      %1017 = vperm.xlu0 %1016, %v311
      %v1018 = vpop.permute.xlu0 %1017
      %1020 = vset.pattern.permute.xlu0 3
      %1021 = vperm.xlu0 %1020, %v312
      %v1022 = vpop.permute.xlu0 %1021
      %1024 = vset.pattern.permute.xlu0 3
      %1025 = vperm.xlu0 %1024, %v313
      %v1026 = vpop.permute.xlu0 %1025
      %1028 = vset.pattern.permute.xlu0 3
      %1029 = vperm.xlu0 %1028, %v314
      %v1030 = vpop.permute.xlu0 %1029
      %v1032 = vlaneseq
      %v1033 = vshrl.u32 %v1032, 7
      %v1034 = vsub.s32 3, %v1033
      %v1035 = vrot.slane %v315, %v1034
      %v1036 = vmul.f32 %v906, %v1035
      %v1037 = vmul.f32 %v910, %v1035
      %v1038 = vmul.f32 %v914, %v1035
      %v1039 = vmul.f32 %v918, %v1035
      %v1040 = vmul.f32 %v922, %v1035
      %v1041 = vmul.f32 %v926, %v1035
      %v1042 = vmul.f32 %v930, %v1035
      %v1043 = vmul.f32 %v934, %v1035
      %v1044 = vmul.f32 %v938, %v1035
      %v1045 = vmul.f32 %v942, %v1035
      %v1046 = vmul.f32 %v946, %v1035
      %v1047 = vmul.f32 %v950, %v1035
      %v1048 = vmul.f32 %v954, %v1035
      %v1049 = vmul.f32 %v958, %v1035
      %v1050 = vmul.f32 %v962, %v1035
      %v1051 = vmul.f32 %v966, %v1035
      %v1052 = vmul.f32 %v970, %v1035
      %v1053 = vmul.f32 %v974, %v1035
      %v1054 = vmul.f32 %v978, %v1035
      %v1055 = vmul.f32 %v982, %v1035
      %v1056 = vmul.f32 %v986, %v1035
      %v1057 = vmul.f32 %v990, %v1035
      %v1058 = vmul.f32 %v994, %v1035
      %v1059 = vmul.f32 %v998, %v1035
      %v1060 = vmul.f32 %v1002, %v1035
      %v1061 = vmul.f32 %v1006, %v1035
      %v1062 = vmul.f32 %v1010, %v1035
      %v1063 = vmul.f32 %v1014, %v1035
      %v1064 = vmul.f32 %v1018, %v1035
      %v1065 = vmul.f32 %v1022, %v1035
      %v1066 = vmul.f32 %v1026, %v1035
      %v1067 = vmul.f32 %v1030, %v1035
      %v1068 = vadd.f32 %v872, %v1036
      %v1069 = vadd.f32 %v873, %v1037
      %v1070 = vadd.f32 %v874, %v1038
      %v1071 = vadd.f32 %v875, %v1039
      %v1072 = vadd.f32 %v876, %v1040
      %v1073 = vadd.f32 %v877, %v1041
      %v1074 = vadd.f32 %v878, %v1042
      %v1075 = vadd.f32 %v879, %v1043
      %v1076 = vadd.f32 %v880, %v1044
      %v1077 = vadd.f32 %v881, %v1045
      %v1078 = vadd.f32 %v882, %v1046
      %v1079 = vadd.f32 %v883, %v1047
      %v1080 = vadd.f32 %v884, %v1048
      %v1081 = vadd.f32 %v885, %v1049
      %v1082 = vadd.f32 %v886, %v1050
      %v1083 = vadd.f32 %v887, %v1051
      %v1084 = vadd.f32 %v888, %v1052
      %v1085 = vadd.f32 %v889, %v1053
      %v1086 = vadd.f32 %v890, %v1054
      %v1087 = vadd.f32 %v891, %v1055
      %v1088 = vadd.f32 %v892, %v1056
      %v1089 = vadd.f32 %v893, %v1057
      %v1090 = vadd.f32 %v894, %v1058
      %v1091 = vadd.f32 %v895, %v1059
      %v1092 = vadd.f32 %v896, %v1060
      %v1093 = vadd.f32 %v897, %v1061
      %v1094 = vadd.f32 %v898, %v1062
      %v1095 = vadd.f32 %v899, %v1063
      %v1096 = vadd.f32 %v900, %v1064
      %v1097 = vadd.f32 %v901, %v1065
      %v1098 = vadd.f32 %v902, %v1066
      %v1099 = vadd.f32 %v903, %v1067
      %v1100 = vld [vmem:[%s2] sm:$0x1]
      %v1102 = vlaneseq
      %v1103 = vshrl.u32 %v1102, 7
      %v1104 = vsub.s32 0, %v1103
      %v1105 = vrot.slane %v1100, %v1104
      %v1107 = vadd.f32 %v1068, %v1105
      %v1108 = vadd.f32 %v1069, %v1105
      %v1109 = vadd.f32 %v1070, %v1105
      %v1110 = vadd.f32 %v1071, %v1105
      %v1111 = vadd.f32 %v1072, %v1105
      %v1112 = vadd.f32 %v1073, %v1105
      %v1113 = vadd.f32 %v1074, %v1105
      %v1114 = vadd.f32 %v1075, %v1105
      %v1115 = vadd.f32 %v1076, %v1105
      %v1116 = vadd.f32 %v1077, %v1105
      %v1117 = vadd.f32 %v1078, %v1105
      %v1118 = vadd.f32 %v1079, %v1105
      %v1119 = vadd.f32 %v1080, %v1105
      %v1120 = vadd.f32 %v1081, %v1105
      %v1121 = vadd.f32 %v1082, %v1105
      %v1122 = vadd.f32 %v1083, %v1105
      %v1123 = vadd.f32 %v1084, %v1105
      %v1124 = vadd.f32 %v1085, %v1105
      %v1125 = vadd.f32 %v1086, %v1105
      %v1126 = vadd.f32 %v1087, %v1105
      %v1127 = vadd.f32 %v1088, %v1105
      %v1128 = vadd.f32 %v1089, %v1105
      %v1129 = vadd.f32 %v1090, %v1105
      %v1130 = vadd.f32 %v1091, %v1105
      %v1131 = vadd.f32 %v1092, %v1105
      %v1132 = vadd.f32 %v1093, %v1105
      %v1133 = vadd.f32 %v1094, %v1105
      %v1134 = vadd.f32 %v1095, %v1105
      %v1135 = vadd.f32 %v1096, %v1105
      %v1136 = vadd.f32 %v1097, %v1105
      %v1137 = vadd.f32 %v1098, %v1105
      %v1138 = vadd.f32 %v1099, %v1105
      %v1139 = vmax.f32 %v1107, 0.0
      %v1140 = vmax.f32 %v1108, 0.0
      %v1141 = vmax.f32 %v1109, 0.0
      %v1142 = vmax.f32 %v1110, 0.0
      %v1143 = vmax.f32 %v1111, 0.0
      %v1144 = vmax.f32 %v1112, 0.0
      %v1145 = vmax.f32 %v1113, 0.0
      %v1146 = vmax.f32 %v1114, 0.0
      %v1147 = vmax.f32 %v1115, 0.0
      %v1148 = vmax.f32 %v1116, 0.0
      %v1149 = vmax.f32 %v1117, 0.0
      %v1150 = vmax.f32 %v1118, 0.0
      %v1151 = vmax.f32 %v1119, 0.0
      %v1152 = vmax.f32 %v1120, 0.0
      %v1153 = vmax.f32 %v1121, 0.0
      %v1154 = vmax.f32 %v1122, 0.0
      %v1155 = vmax.f32 %v1123, 0.0
      %v1156 = vmax.f32 %v1124, 0.0
      %v1157 = vmax.f32 %v1125, 0.0
      %v1158 = vmax.f32 %v1126, 0.0
      %v1159 = vmax.f32 %v1127, 0.0
      %v1160 = vmax.f32 %v1128, 0.0
      %v1161 = vmax.f32 %v1129, 0.0
      %v1162 = vmax.f32 %v1130, 0.0
      %v1163 = vmax.f32 %v1131, 0.0
      %v1164 = vmax.f32 %v1132, 0.0
      %v1165 = vmax.f32 %v1133, 0.0
      %v1166 = vmax.f32 %v1134, 0.0
      %v1167 = vmax.f32 %v1135, 0.0
      %v1168 = vmax.f32 %v1136, 0.0
      %v1169 = vmax.f32 %v1137, 0.0
      %v1170 = vmax.f32 %v1138, 0.0
      %v1171 = vld [vmem:[%s3] sm:$0xff]
      %v1172 = vld [vmem:[%s3 + $0x8] sm:$0xff]
      %v1173 = vld [vmem:[%s3 + $0x10] sm:$0xff]
      %v1174 = vld [vmem:[%s4] sm:$0x1]
      %v1176 = vlaneseq
      %v1177 = vshrl.u32 %v1176, 7
      %v1178 = vsub.s32 0, %v1177
      %v1179 = vrot.slane %v1174, %v1178
      %vm1181 = vcmask 195584
      %v1183 = vsel %vm1181, %v1139, 0
      %v1186 = vsel %vm1181, %v1140, 0
      %v1189 = vsel %vm1181, %v1141, 0
      %v1192 = vsel %vm1181, %v1142, 0
      %v1195 = vsel %vm1181, %v1143, 0
      %v1198 = vsel %vm1181, %v1144, 0
      %v1201 = vsel %vm1181, %v1145, 0
      %v1204 = vsel %vm1181, %v1146, 0
      %v1207 = vsel %vm1181, %v1147, 0
      %v1210 = vsel %vm1181, %v1148, 0
      %v1213 = vsel %vm1181, %v1149, 0
      %v1216 = vsel %vm1181, %v1150, 0
      %v1219 = vsel %vm1181, %v1151, 0
      %v1222 = vsel %vm1181, %v1152, 0
      %v1225 = vsel %vm1181, %v1153, 0
      %v1228 = vsel %vm1181, %v1154, 0
      %v1231 = vsel %vm1181, %v1155, 0
      %v1234 = vsel %vm1181, %v1156, 0
      %v1237 = vsel %vm1181, %v1157, 0
      %v1240 = vsel %vm1181, %v1158, 0
      %v1243 = vsel %vm1181, %v1159, 0
      %v1246 = vsel %vm1181, %v1160, 0
      %v1249 = vsel %vm1181, %v1161, 0
      %v1252 = vsel %vm1181, %v1162, 0
      %v1255 = vsel %vm1181, %v1163, 0
      %v1258 = vsel %vm1181, %v1164, 0
      %v1261 = vsel %vm1181, %v1165, 0
      %v1264 = vsel %vm1181, %v1166, 0
      %v1267 = vsel %vm1181, %v1167, 0
      %v1270 = vsel %vm1181, %v1168, 0
      %v1273 = vsel %vm1181, %v1169, 0
      %v1276 = vsel %vm1181, %v1170, 0
      %1278 = vmatprep.subr.mxu0 0.0
      %1279 = vmatpush1.msra.mxu0 %v1171
      %1280 = vmatprep.subr.mxu0 0.0
      %1281 = vmatpush1.msra.mxu0 %v1172
      %1282 = vmatprep.subr.mxu0 0.0
      %1283 = vmatpush1.msra.mxu0 %v1173
      %1284 = vmatprep.subr.mxu0 0.0
      %1285 = vmatpush1.msra.mxu0 0.0
      %1286 = vmatprep.subr.mxu0 0.0
      %1287 = vmatpush1.msra.mxu0 0.0
      %1288 = vmatprep.subr.mxu0 0.0
      %1289 = vmatpush1.msra.mxu0 0.0
      %1290 = vmatprep.subr.mxu0 0.0
      %1291 = vmatpush1.msra.mxu0 0.0
      %1292 = vmatprep.subr.mxu0 0.0
      %1293 = vmatpush1.msra.mxu0 0.0
      %1294 = vmatprep.subr.mxu0 0.0
      %1295 = vmatpush1.msra.mxu0 0.0
      %1296 = vmatprep.subr.mxu0 0.0
      %1297 = vmatpush1.msra.mxu0 0.0
      %1298 = vmatprep.subr.mxu0 0.0
      %1299 = vmatpush1.msra.mxu0 0.0
      %1300 = vmatprep.subr.mxu0 0.0
      %1301 = vmatpush1.msra.mxu0 0.0
      %1302 = vmatprep.subr.mxu0 0.0
      %1303 = vmatpush1.msra.mxu0 0.0
      %1304 = vmatprep.subr.mxu0 0.0
      %1305 = vmatpush1.msra.mxu0 0.0
      %1306 = vmatprep.subr.mxu0 0.0
      %1307 = vmatpush1.msra.mxu0 0.0
      %1308 = vmatprep.subr.mxu0 0.0
      %1309 = vmatpush1.msra.mxu0 0.0
      %1310 = vmatprep.subr.mxu0 0.0
      %1311 = vmatpush1.msra.mxu0 0.0
      %1312 = vmatprep.subr.mxu0 0.0
      %1313 = vmatpush1.msra.mxu0 0.0
      %1314 = vmatprep.subr.mxu0 0.0
      %1315 = vmatpush1.msra.mxu0 0.0
      %1316 = vmatprep.subr.mxu0 0.0
      %1317 = vmatpush1.msra.mxu0 0.0
      %1318 = vmatprep.subr.mxu0 0.0
      %1319 = vmatpush1.msra.mxu0 0.0
      %1320 = vmatprep.subr.mxu0 0.0
      %1321 = vmatpush1.msra.mxu0 0.0
      %1322 = vmatprep.subr.mxu0 0.0
      %1323 = vmatpush1.msra.mxu0 0.0
      %1324 = vmatprep.subr.mxu0 0.0
      %1325 = vmatpush1.msra.mxu0 0.0
      %1326 = vmatprep.subr.mxu0 0.0
      %1327 = vmatpush1.msra.mxu0 0.0
      %1328 = vmatprep.subr.mxu0 0.0
      %1329 = vmatpush1.msra.mxu0 0.0
      %1330 = vmatprep.subr.mxu0 0.0
      %1331 = vmatpush1.msra.mxu0 0.0
      %1332 = vmatprep.subr.mxu0 0.0
      %1333 = vmatpush1.msra.mxu0 0.0
      %1334 = vmatprep.subr.mxu0 0.0
      %1335 = vmatpush1.msra.mxu0 0.0
      %1336 = vmatprep.subr.mxu0 0.0
      %1337 = vmatpush1.msra.mxu0 0.0
      %1338 = vmatprep.subr.mxu0 0.0
      %1339 = vmatpush1.msra.mxu0 0.0
      %1340 = vmatprep.subr.mxu0 0.0
      %1341 = vmatpush1.msra.mxu0 0.0
      %1342 = vmatprep.mubr.f32.mxu0 0.0
      %1343 = vmatmul.mubr.f32.gmra.mrb[0].mxu0 %v1183
      %v1344 = vpop.f32.mrb[0].mxu0
      %v1345 = vadd.f32 %v1179, %v1344
      %v1346 = vpop.f32.mrb[0].mxu0
      %1347 = vmatprep.mubr.f32.mxu0 0.0
      %1348 = vmatmul.mubr.f32.gmra.mrb[0].mxu0 %v1186
      %v1349 = vpop.f32.mrb[0].mxu0
      %v1350 = vadd.f32 %v1179, %v1349
      %v1351 = vpop.f32.mrb[0].mxu0
      %1352 = vmatprep.mubr.f32.mxu0 0.0
      %1353 = vmatmul.mubr.f32.gmra.mrb[0].mxu0 %v1189
      %v1354 = vpop.f32.mrb[0].mxu0
      %v1355 = vadd.f32 %v1179, %v1354
      %v1356 = vpop.f32.mrb[0].mxu0
      %1357 = vmatprep.mubr.f32.mxu0 0.0
      %1358 = vmatmul.mubr.f32.gmra.mrb[0].mxu0 %v1192
      %v1359 = vpop.f32.mrb[0].mxu0
      %v1360 = vadd.f32 %v1179, %v1359
      %v1361 = vpop.f32.mrb[0].mxu0
      %1362 = vmatprep.mubr.f32.mxu0 0.0
      %1363 = vmatmul.mubr.f32.gmra.mrb[0].mxu0 %v1195
      %v1364 = vpop.f32.mrb[0].mxu0
      %v1365 = vadd.f32 %v1179, %v1364
      %v1366 = vpop.f32.mrb[0].mxu0
      %1367 = vmatprep.mubr.f32.mxu0 0.0
      %1368 = vmatmul.mubr.f32.gmra.mrb[0].mxu0 %v1198
      %v1369 = vpop.f32.mrb[0].mxu0
      %v1370 = vadd.f32 %v1179, %v1369
      %v1371 = vpop.f32.mrb[0].mxu0
      %1372 = vmatprep.mubr.f32.mxu0 0.0
      %1373 = vmatmul.mubr.f32.gmra.mrb[0].mxu0 %v1201
      %v1374 = vpop.f32.mrb[0].mxu0
      %v1375 = vadd.f32 %v1179, %v1374
      %v1376 = vpop.f32.mrb[0].mxu0
      %1377 = vmatprep.mubr.f32.mxu0 0.0
      %1378 = vmatmul.mubr.f32.gmra.mrb[0].mxu0 %v1204
      %v1379 = vpop.f32.mrb[0].mxu0
      %v1380 = vadd.f32 %v1179, %v1379
      %v1381 = vpop.f32.mrb[0].mxu0
      %1382 = vmatprep.mubr.f32.mxu0 0.0
      %1383 = vmatmul.mubr.f32.gmra.mrb[0].mxu0 %v1207
      %v1384 = vpop.f32.mrb[0].mxu0
      %v1385 = vadd.f32 %v1179, %v1384
      %v1386 = vpop.f32.mrb[0].mxu0
      %1387 = vmatprep.mubr.f32.mxu0 0.0
      %1388 = vmatmul.mubr.f32.gmra.mrb[0].mxu0 %v1210
      %v1389 = vpop.f32.mrb[0].mxu0
      %v1390 = vadd.f32 %v1179, %v1389
      %v1391 = vpop.f32.mrb[0].mxu0
      %1392 = vmatprep.mubr.f32.mxu0 0.0
      %1393 = vmatmul.mubr.f32.gmra.mrb[0].mxu0 %v1213
      %v1394 = vpop.f32.mrb[0].mxu0
      %v1395 = vadd.f32 %v1179, %v1394
      %v1396 = vpop.f32.mrb[0].mxu0
      %1397 = vmatprep.mubr.f32.mxu0 0.0
      %1398 = vmatmul.mubr.f32.gmra.mrb[0].mxu0 %v1216
      %v1399 = vpop.f32.mrb[0].mxu0
      %v1400 = vadd.f32 %v1179, %v1399
      %v1401 = vpop.f32.mrb[0].mxu0
      %1402 = vmatprep.mubr.f32.mxu0 0.0
      %1403 = vmatmul.mubr.f32.gmra.mrb[0].mxu0 %v1219
      %v1404 = vpop.f32.mrb[0].mxu0
      %v1405 = vadd.f32 %v1179, %v1404
      %v1406 = vpop.f32.mrb[0].mxu0
      %1407 = vmatprep.mubr.f32.mxu0 0.0
      %1408 = vmatmul.mubr.f32.gmra.mrb[0].mxu0 %v1222
      %v1409 = vpop.f32.mrb[0].mxu0
      %v1410 = vadd.f32 %v1179, %v1409
      %v1411 = vpop.f32.mrb[0].mxu0
      %1412 = vmatprep.mubr.f32.mxu0 0.0
      %1413 = vmatmul.mubr.f32.gmra.mrb[0].mxu0 %v1225
      %v1414 = vpop.f32.mrb[0].mxu0
      %v1415 = vadd.f32 %v1179, %v1414
      %v1416 = vpop.f32.mrb[0].mxu0
      %1417 = vmatprep.mubr.f32.mxu0 0.0
      %1418 = vmatmul.mubr.f32.gmra.mrb[0].mxu0 %v1228
      %v1419 = vpop.f32.mrb[0].mxu0
      %v1420 = vadd.f32 %v1179, %v1419
      %v1421 = vpop.f32.mrb[0].mxu0
      %1422 = vmatprep.mubr.f32.mxu0 0.0
      %1423 = vmatmul.mubr.f32.gmra.mrb[0].mxu0 %v1231
      %v1424 = vpop.f32.mrb[0].mxu0
      %v1425 = vadd.f32 %v1179, %v1424
      %v1426 = vpop.f32.mrb[0].mxu0
      %1427 = vmatprep.mubr.f32.mxu0 0.0
      %1428 = vmatmul.mubr.f32.gmra.mrb[0].mxu0 %v1234
      %v1429 = vpop.f32.mrb[0].mxu0
      %v1430 = vadd.f32 %v1179, %v1429
      %v1431 = vpop.f32.mrb[0].mxu0
      %1432 = vmatprep.mubr.f32.mxu0 0.0
      %1433 = vmatmul.mubr.f32.gmra.mrb[0].mxu0 %v1237
      %v1434 = vpop.f32.mrb[0].mxu0
      %v1435 = vadd.f32 %v1179, %v1434
      %v1436 = vpop.f32.mrb[0].mxu0
      %1437 = vmatprep.mubr.f32.mxu0 0.0
      %1438 = vmatmul.mubr.f32.gmra.mrb[0].mxu0 %v1240
      %v1439 = vpop.f32.mrb[0].mxu0
      %v1440 = vadd.f32 %v1179, %v1439
      %v1441 = vpop.f32.mrb[0].mxu0
      %1442 = vmatprep.mubr.f32.mxu0 0.0
      %1443 = vmatmul.mubr.f32.gmra.mrb[0].mxu0 %v1243
      %v1444 = vpop.f32.mrb[0].mxu0
      %v1445 = vadd.f32 %v1179, %v1444
      %v1446 = vpop.f32.mrb[0].mxu0
      %1447 = vmatprep.mubr.f32.mxu0 0.0
      %1448 = vmatmul.mubr.f32.gmra.mrb[0].mxu0 %v1246
      %v1449 = vpop.f32.mrb[0].mxu0
      %v1450 = vadd.f32 %v1179, %v1449
      %v1451 = vpop.f32.mrb[0].mxu0
      %1452 = vmatprep.mubr.f32.mxu0 0.0
      %1453 = vmatmul.mubr.f32.gmra.mrb[0].mxu0 %v1249
      %v1454 = vpop.f32.mrb[0].mxu0
      %v1455 = vadd.f32 %v1179, %v1454
      %v1456 = vpop.f32.mrb[0].mxu0
      %1457 = vmatprep.mubr.f32.mxu0 0.0
      %1458 = vmatmul.mubr.f32.gmra.mrb[0].mxu0 %v1252
      %v1459 = vpop.f32.mrb[0].mxu0
      %v1460 = vadd.f32 %v1179, %v1459
      %v1461 = vpop.f32.mrb[0].mxu0
      %1462 = vmatprep.mubr.f32.mxu0 0.0
      %1463 = vmatmul.mubr.f32.gmra.mrb[0].mxu0 %v1255
      %v1464 = vpop.f32.mrb[0].mxu0
      %v1465 = vadd.f32 %v1179, %v1464
      %v1466 = vpop.f32.mrb[0].mxu0
      %1467 = vmatprep.mubr.f32.mxu0 0.0
      %1468 = vmatmul.mubr.f32.gmra.mrb[0].mxu0 %v1258
      %v1469 = vpop.f32.mrb[0].mxu0
      %v1470 = vadd.f32 %v1179, %v1469
      %v1471 = vpop.f32.mrb[0].mxu0
      %1472 = vmatprep.mubr.f32.mxu0 0.0
      %1473 = vmatmul.mubr.f32.gmra.mrb[0].mxu0 %v1261
      %v1474 = vpop.f32.mrb[0].mxu0
      %v1475 = vadd.f32 %v1179, %v1474
      %v1476 = vpop.f32.mrb[0].mxu0
      %1477 = vmatprep.mubr.f32.mxu0 0.0
      %1478 = vmatmul.mubr.f32.gmra.mrb[0].mxu0 %v1264
      %v1479 = vpop.f32.mrb[0].mxu0
      %v1480 = vadd.f32 %v1179, %v1479
      %v1481 = vpop.f32.mrb[0].mxu0
      %1482 = vmatprep.mubr.f32.mxu0 0.0
      %1483 = vmatmul.mubr.f32.gmra.mrb[0].mxu0 %v1267
      %v1484 = vpop.f32.mrb[0].mxu0
      %v1485 = vadd.f32 %v1179, %v1484
      %v1486 = vpop.f32.mrb[0].mxu0
      %1487 = vmatprep.mubr.f32.mxu0 0.0
      %1488 = vmatmul.mubr.f32.gmra.mrb[0].mxu0 %v1270
      %v1489 = vpop.f32.mrb[0].mxu0
      %v1490 = vadd.f32 %v1179, %v1489
      %v1491 = vpop.f32.mrb[0].mxu0
      %1492 = vmatprep.mubr.f32.mxu0 0.0
      %1493 = vmatmul.mubr.f32.gmra.mrb[0].mxu0 %v1273
      %v1494 = vpop.f32.mrb[0].mxu0
      %v1495 = vadd.f32 %v1179, %v1494
      %v1496 = vpop.f32.mrb[0].mxu0
      %1497 = vmatprep.mubr.f32.mxu0 0.0
      %1498 = vmatmul.mubr.f32.gmra.mrb[0].mxu0 %v1276
      %v1499 = vpop.f32.mrb[0].mxu0
      %v1500 = vadd.f32 %v1179, %v1499
      %v1501 = vpop.f32.mrb[0].mxu0
      %1502 = vdwg.mxu0
      %v1503 = vmax.f32 %v1345, 0.0
      %v1504 = vmax.f32 %v1350, 0.0
      %v1505 = vmax.f32 %v1355, 0.0
      %v1506 = vmax.f32 %v1360, 0.0
      %v1507 = vmax.f32 %v1365, 0.0
      %v1508 = vmax.f32 %v1370, 0.0
      %v1509 = vmax.f32 %v1375, 0.0
      %v1510 = vmax.f32 %v1380, 0.0
      %v1511 = vmax.f32 %v1385, 0.0
      %v1512 = vmax.f32 %v1390, 0.0
      %v1513 = vmax.f32 %v1395, 0.0
      %v1514 = vmax.f32 %v1400, 0.0
      %v1515 = vmax.f32 %v1405, 0.0
      %v1516 = vmax.f32 %v1410, 0.0
      %v1517 = vmax.f32 %v1415, 0.0
      %v1518 = vmax.f32 %v1420, 0.0
      %v1519 = vmax.f32 %v1425, 0.0
      %v1520 = vmax.f32 %v1430, 0.0
      %v1521 = vmax.f32 %v1435, 0.0
      %v1522 = vmax.f32 %v1440, 0.0
      %v1523 = vmax.f32 %v1445, 0.0
      %v1524 = vmax.f32 %v1450, 0.0
      %v1525 = vmax.f32 %v1455, 0.0
      %v1526 = vmax.f32 %v1460, 0.0
      %v1527 = vmax.f32 %v1465, 0.0
      %v1528 = vmax.f32 %v1470, 0.0
      %v1529 = vmax.f32 %v1475, 0.0
      %v1530 = vmax.f32 %v1480, 0.0
      %v1531 = vmax.f32 %v1485, 0.0
      %v1532 = vmax.f32 %v1490, 0.0
      %v1533 = vmax.f32 %v1495, 0.0
      %v1534 = vmax.f32 %v1500, 0.0
      %v1535 = vld [vmem:[%s5] sm:$0x1]
      %v1537 = vlaneseq
      %v1538 = vshrl.u32 %v1537, 7
      %v1539 = vsub.s32 0, %v1538
      %v1540 = vrot.slane %v1535, %v1539
      %v1542 = vmul.f32 %v1503, %v1540
      %v1543 = vmul.f32 %v1504, %v1540
      %v1544 = vmul.f32 %v1505, %v1540
      %v1545 = vmul.f32 %v1506, %v1540
      %v1546 = vmul.f32 %v1507, %v1540
      %v1547 = vmul.f32 %v1508, %v1540
      %v1548 = vmul.f32 %v1509, %v1540
      %v1549 = vmul.f32 %v1510, %v1540
      %v1550 = vmul.f32 %v1511, %v1540
      %v1551 = vmul.f32 %v1512, %v1540
      %v1552 = vmul.f32 %v1513, %v1540
      %v1553 = vmul.f32 %v1514, %v1540
      %v1554 = vmul.f32 %v1515, %v1540
      %v1555 = vmul.f32 %v1516, %v1540
      %v1556 = vmul.f32 %v1517, %v1540
      %v1557 = vmul.f32 %v1518, %v1540
      %v1558 = vmul.f32 %v1519, %v1540
      %v1559 = vmul.f32 %v1520, %v1540
      %v1560 = vmul.f32 %v1521, %v1540
      %v1561 = vmul.f32 %v1522, %v1540
      %v1562 = vmul.f32 %v1523, %v1540
      %v1563 = vmul.f32 %v1524, %v1540
      %v1564 = vmul.f32 %v1525, %v1540
      %v1565 = vmul.f32 %v1526, %v1540
      %v1566 = vmul.f32 %v1527, %v1540
      %v1567 = vmul.f32 %v1528, %v1540
      %v1568 = vmul.f32 %v1529, %v1540
      %v1569 = vmul.f32 %v1530, %v1540
      %v1570 = vmul.f32 %v1531, %v1540
      %v1571 = vmul.f32 %v1532, %v1540
      %v1572 = vmul.f32 %v1533, %v1540
      %v1573 = vmul.f32 %v1534, %v1540
      %v1574 = vsel %vm1181, %v1542, 0.0
      %1575 = vadd.xlane.f32.xlu0 %v1574
      %v1576 = vpop.xlane.xlu0 %1575
      %v1577 = vsel %vm1181, %v1543, 0.0
      %1578 = vadd.xlane.f32.xlu0 %v1577
      %v1579 = vpop.xlane.xlu0 %1578
      %v1580 = vsel %vm1181, %v1544, 0.0
      %1581 = vadd.xlane.f32.xlu0 %v1580
      %v1582 = vpop.xlane.xlu0 %1581
      %v1583 = vsel %vm1181, %v1545, 0.0
      %1584 = vadd.xlane.f32.xlu0 %v1583
      %v1585 = vpop.xlane.xlu0 %1584
      %v1586 = vsel %vm1181, %v1546, 0.0
      %1587 = vadd.xlane.f32.xlu0 %v1586
      %v1588 = vpop.xlane.xlu0 %1587
      %v1589 = vsel %vm1181, %v1547, 0.0
      %1590 = vadd.xlane.f32.xlu0 %v1589
      %v1591 = vpop.xlane.xlu0 %1590
      %v1592 = vsel %vm1181, %v1548, 0.0
      %1593 = vadd.xlane.f32.xlu0 %v1592
      %v1594 = vpop.xlane.xlu0 %1593
      %v1595 = vsel %vm1181, %v1549, 0.0
      %1596 = vadd.xlane.f32.xlu0 %v1595
      %v1597 = vpop.xlane.xlu0 %1596
      %v1598 = vsel %vm1181, %v1550, 0.0
      %1599 = vadd.xlane.f32.xlu0 %v1598
      %v1600 = vpop.xlane.xlu0 %1599
      %v1601 = vsel %vm1181, %v1551, 0.0
      %1602 = vadd.xlane.f32.xlu0 %v1601
      %v1603 = vpop.xlane.xlu0 %1602
      %v1604 = vsel %vm1181, %v1552, 0.0
      %1605 = vadd.xlane.f32.xlu0 %v1604
      %v1606 = vpop.xlane.xlu0 %1605
      %v1607 = vsel %vm1181, %v1553, 0.0
      %1608 = vadd.xlane.f32.xlu0 %v1607
      %v1609 = vpop.xlane.xlu0 %1608
      %v1610 = vsel %vm1181, %v1554, 0.0
      %1611 = vadd.xlane.f32.xlu0 %v1610
      %v1612 = vpop.xlane.xlu0 %1611
      %v1613 = vsel %vm1181, %v1555, 0.0
      %1614 = vadd.xlane.f32.xlu0 %v1613
      %v1615 = vpop.xlane.xlu0 %1614
      %v1616 = vsel %vm1181, %v1556, 0.0
      %1617 = vadd.xlane.f32.xlu0 %v1616
      %v1618 = vpop.xlane.xlu0 %1617
      %v1619 = vsel %vm1181, %v1557, 0.0
      %1620 = vadd.xlane.f32.xlu0 %v1619
      %v1621 = vpop.xlane.xlu0 %1620
      %v1622 = vsel %vm1181, %v1558, 0.0
      %1623 = vadd.xlane.f32.xlu0 %v1622
      %v1624 = vpop.xlane.xlu0 %1623
      %v1625 = vsel %vm1181, %v1559, 0.0
      %1626 = vadd.xlane.f32.xlu0 %v1625
      %v1627 = vpop.xlane.xlu0 %1626
      %v1628 = vsel %vm1181, %v1560, 0.0
      %1629 = vadd.xlane.f32.xlu0 %v1628
      %v1630 = vpop.xlane.xlu0 %1629
      %v1631 = vsel %vm1181, %v1561, 0.0
      %1632 = vadd.xlane.f32.xlu0 %v1631
      %v1633 = vpop.xlane.xlu0 %1632
      %v1634 = vsel %vm1181, %v1562, 0.0
      %1635 = vadd.xlane.f32.xlu0 %v1634
      %v1636 = vpop.xlane.xlu0 %1635
      %v1637 = vsel %vm1181, %v1563, 0.0
      %1638 = vadd.xlane.f32.xlu0 %v1637
      %v1639 = vpop.xlane.xlu0 %1638
      %v1640 = vsel %vm1181, %v1564, 0.0
      %1641 = vadd.xlane.f32.xlu0 %v1640
      %v1642 = vpop.xlane.xlu0 %1641
      %v1643 = vsel %vm1181, %v1565, 0.0
      %1644 = vadd.xlane.f32.xlu0 %v1643
      %v1645 = vpop.xlane.xlu0 %1644
      %v1646 = vsel %vm1181, %v1566, 0.0
      %1647 = vadd.xlane.f32.xlu0 %v1646
      %v1648 = vpop.xlane.xlu0 %1647
      %v1649 = vsel %vm1181, %v1567, 0.0
      %1650 = vadd.xlane.f32.xlu0 %v1649
      %v1651 = vpop.xlane.xlu0 %1650
      %v1652 = vsel %vm1181, %v1568, 0.0
      %1653 = vadd.xlane.f32.xlu0 %v1652
      %v1654 = vpop.xlane.xlu0 %1653
      %v1655 = vsel %vm1181, %v1569, 0.0
      %1656 = vadd.xlane.f32.xlu0 %v1655
      %v1657 = vpop.xlane.xlu0 %1656
      %v1658 = vsel %vm1181, %v1570, 0.0
      %1659 = vadd.xlane.f32.xlu0 %v1658
      %v1660 = vpop.xlane.xlu0 %1659
      %v1661 = vsel %vm1181, %v1571, 0.0
      %1662 = vadd.xlane.f32.xlu0 %v1661
      %v1663 = vpop.xlane.xlu0 %1662
      %v1664 = vsel %vm1181, %v1572, 0.0
      %1665 = vadd.xlane.f32.xlu0 %v1664
      %v1666 = vpop.xlane.xlu0 %1665
      %v1667 = vsel %vm1181, %v1573, 0.0
      %1668 = vadd.xlane.f32.xlu0 %v1667
      %v1669 = vpop.xlane.xlu0 %1668
      %s1670 = sld [smem:[#allocation2]]
      %v1671 = vstv %s1670
      %v1672 = vadd.f32 %v1576, %v1671
      %v1673 = vadd.f32 %v1579, %v1671
      %v1674 = vadd.f32 %v1582, %v1671
      %v1675 = vadd.f32 %v1585, %v1671
      %v1676 = vadd.f32 %v1588, %v1671
      %v1677 = vadd.f32 %v1591, %v1671
      %v1678 = vadd.f32 %v1594, %v1671
      %v1679 = vadd.f32 %v1597, %v1671
      %v1680 = vadd.f32 %v1600, %v1671
      %v1681 = vadd.f32 %v1603, %v1671
      %v1682 = vadd.f32 %v1606, %v1671
      %v1683 = vadd.f32 %v1609, %v1671
      %v1684 = vadd.f32 %v1612, %v1671
      %v1685 = vadd.f32 %v1615, %v1671
      %v1686 = vadd.f32 %v1618, %v1671
      %v1687 = vadd.f32 %v1621, %v1671
      %v1688 = vadd.f32 %v1624, %v1671
      %v1689 = vadd.f32 %v1627, %v1671
      %v1690 = vadd.f32 %v1630, %v1671
      %v1691 = vadd.f32 %v1633, %v1671
      %v1692 = vadd.f32 %v1636, %v1671
      %v1693 = vadd.f32 %v1639, %v1671
      %v1694 = vadd.f32 %v1642, %v1671
      %v1695 = vadd.f32 %v1645, %v1671
      %v1696 = vadd.f32 %v1648, %v1671
      %v1697 = vadd.f32 %v1651, %v1671
      %v1698 = vadd.f32 %v1654, %v1671
      %v1699 = vadd.f32 %v1657, %v1671
      %v1700 = vadd.f32 %v1660, %v1671
      %v1701 = vadd.f32 %v1663, %v1671
      %v1702 = vadd.f32 %v1666, %v1671
      %v1703 = vadd.f32 %v1669, %v1671
      %vm1704 = vcmask 7168
      %1705 = vst.msk [vmem:[%s281] sm:$0xff] %vm1704, %v1672
      %1706 = vst.msk [vmem:[%s281 + $0x8] sm:$0xff] %vm1704, %v1673
      %1707 = vst.msk [vmem:[%s281 + $0x10] sm:$0xff] %vm1704, %v1674
      %1708 = vst.msk [vmem:[%s281 + $0x18] sm:$0xff] %vm1704, %v1675
      %1709 = vst.msk [vmem:[%s281 + $0x20] sm:$0xff] %vm1704, %v1676
      %1710 = vst.msk [vmem:[%s281 + $0x28] sm:$0xff] %vm1704, %v1677
      %1711 = vst.msk [vmem:[%s281 + $0x30] sm:$0xff] %vm1704, %v1678
      %1712 = vst.msk [vmem:[%s281 + $0x38] sm:$0xff] %vm1704, %v1679
      %1713 = vst.msk [vmem:[%s281 + $0x40] sm:$0xff] %vm1704, %v1680
      %1714 = vst.msk [vmem:[%s281 + $0x48] sm:$0xff] %vm1704, %v1681
      %1715 = vst.msk [vmem:[%s281 + $0x50] sm:$0xff] %vm1704, %v1682
      %1716 = vst.msk [vmem:[%s281 + $0x58] sm:$0xff] %vm1704, %v1683
      %1717 = vst.msk [vmem:[%s281 + $0x60] sm:$0xff] %vm1704, %v1684
      %1718 = vst.msk [vmem:[%s281 + $0x68] sm:$0xff] %vm1704, %v1685
      %1719 = vst.msk [vmem:[%s281 + $0x70] sm:$0xff] %vm1704, %v1686
      %1720 = vst.msk [vmem:[%s281 + $0x78] sm:$0xff] %vm1704, %v1687
      %1721 = vst.msk [vmem:[%s281 + $0x80] sm:$0xff] %vm1704, %v1688
      %1722 = vst.msk [vmem:[%s281 + $0x88] sm:$0xff] %vm1704, %v1689
      %1723 = vst.msk [vmem:[%s281 + $0x90] sm:$0xff] %vm1704, %v1690
      %1724 = vst.msk [vmem:[%s281 + $0x98] sm:$0xff] %vm1704, %v1691
      %1725 = vst.msk [vmem:[%s281 + $0xa0] sm:$0xff] %vm1704, %v1692
      %1726 = vst.msk [vmem:[%s281 + $0xa8] sm:$0xff] %vm1704, %v1693
      %1727 = vst.msk [vmem:[%s281 + $0xb0] sm:$0xff] %vm1704, %v1694
      %1728 = vst.msk [vmem:[%s281 + $0xb8] sm:$0xff] %vm1704, %v1695
      %1729 = vst.msk [vmem:[%s281 + $0xc0] sm:$0xff] %vm1704, %v1696
      %1730 = vst.msk [vmem:[%s281 + $0xc8] sm:$0xff] %vm1704, %v1697
      %1731 = vst.msk [vmem:[%s281 + $0xd0] sm:$0xff] %vm1704, %v1698
      %1732 = vst.msk [vmem:[%s281 + $0xd8] sm:$0xff] %vm1704, %v1699
      %1733 = vst.msk [vmem:[%s281 + $0xe0] sm:$0xff] %vm1704, %v1700
      %1734 = vst.msk [vmem:[%s281 + $0xe8] sm:$0xff] %vm1704, %v1701
      %1735 = vst.msk [vmem:[%s281 + $0xf0] sm:$0xff] %vm1704, %v1702
      %1736 = vst.msk [vmem:[%s281 + $0xf8] sm:$0xff] %vm1704, %v1703
      %s1737 = smul.u32 32, %s19
      %p1738 = scmp.lt.s32.totalorder %s1737, 63
      %s1739 = scalar_select %p1738, %s1737, 63
      %s1740 = smul.addr %s1739, 8
      %s1741 = scalar_lea.vmem %s7, %s1740
      // Predicated region
      $region49: #{critic_forward.1} parent=47 // pred_check
        %p1742 = pneg %p189
      $region50: #{critic_forward.1} parent=47 // pred_check_branch
        %1744 = sbr.rel (%p1742) target = $region52
      $region51: #{critic_forward.1} parent=47 // pred_region
        %s1745 = smul.u32 32, %s19
      $region52: #{critic_forward.1} parent=47 // pred_fallthru
        _
    $region48: #{critic_forward.1} parent=5 // pred_fallthru
      _
    %p1746 = scmp.le.s32.totalorder 2, %s14
    // Predicated region
    $region53: #{critic_forward.1} parent=5 // pred_check
      %p1747 = pneg %p1746
    $region54: #{critic_forward.1} parent=5 // pred_check_branch
      %1749 = sbr.rel (%p1747) target = $region56
    $region55: #{critic_forward.1} parent=5 // pred_region
      %s1750 = ssub.s32 %s14, 2
      // Predicated region
      $region57: #{critic_forward.1} parent=55 // pred_check
        %p1751 = pneg %p195
      $region58: #{critic_forward.1} parent=55 // pred_check_branch
        %1753 = sbr.rel (%p1751) target = $region60
      $region59: #{critic_forward.1} parent=55 // pred_region
        %s1754 = smul.u32 32, %s20
        %p1755 = scmp.lt.s32.totalorder %s1754, 63
        %s1756 = scalar_select %p1755, %s1754, 63
        %s1757 = smul.addr %s1756, 8
        %s1758 = scalar_lea.vmem %s7, %s1757
      $region60: #{critic_forward.1} parent=55 // pred_fallthru
        _
    $region56: #{critic_forward.1} parent=5 // pred_fallthru
      _
  $region6: #{critic_forward.1} parent=0 // loop_footer
    %s18 = sadd.s32 1, %s14
  $region7: #{critic_forward.1} parent=0 // loop_footer_branch
    %13 = sbr.rel target = $region3
  $region8: #{critic_forward.1} parent=0 // loop_exit
    _

</llo_original>
